<compile_context>
chip_gen: v5e
topology: v5e:2x2
jax: 0.10.0
libtpu: 0.0.40
codegen_flags: <defaults>
</compile_context>

<pallas_src>
import functools

import jax
import jax.numpy as jnp
from jax.experimental import pallas as pl
from jax.experimental.pallas import tpu as pltpu

EPS = 1e-5


def _layernorm(x, gamma, beta):
    mu = jnp.mean(x, axis=-1, keepdims=True)
    var = jnp.mean((x - mu) * (x - mu), axis=-1, keepdims=True)
    return (x - mu) * jax.lax.rsqrt(var + EPS) * gamma + beta


def _tb_kernel(x_ref,
               wqkv_ref, bqkv_ref, wo_ref, bo_ref,
               w1_ref, b1_ref, w2_ref, b2_ref,
               g1_ref, be1_ref, g2_ref, be2_ref,
               o_ref, ctx_ref,
               *, nhead, bt, seq, approx_recip):
    E = x_ref.shape[-1]
    hd = E // nhead
    M = bt * seq
    cdt = wqkv_ref.dtype                     # compute (MXU) dtype: bf16 or f32

    # Residual stream stays f32; matmul operands are cast to `cdt`.
    x = x_ref[...].reshape(M, E)              # free when seq % 8 == 0
    xc = x.astype(cdt)

    # Fused QKV projection: one tall (M,E) x (E,3E) MXU pass.  The softmax
    # scale is already folded into the Wq / bq columns of wqkv / bqkv.
    qkv = jnp.dot(xc, wqkv_ref[...], preferred_element_type=jnp.float32) + bqkv_ref[...]
    q = qkv[:, :E].astype(cdt)
    k = qkv[:, E:2 * E].astype(cdt)
    v = qkv[:, 2 * E:].astype(cdt)

    # Attention core: per-head loop (static, small), batched over the batch
    # tile with 3-D einsums contracting the last dim (no explicit K transpose,
    # no per-(b,h) unrolled bodies, no ctx concat).  Per-head context is
    # written into a preallocated (M, E) VMEM scratch so the output projection
    # is a single K=E matmul.
    # TODO(synk): with hd < 128 each per-head score/PV matmul under-fills the
    # MXU; production shapes should use head_dim >= 128 (or pack heads).  For
    # large S, replace the materialized (S,S) score tile with flash-style
    # online softmax over KV chunks.
    for h in range(nhead):
        lo, hi = h * hd, (h + 1) * hd
        qh = q[:, lo:hi].reshape(bt, seq, hd)
        kh = k[:, lo:hi].reshape(bt, seq, hd)
        vh = v[:, lo:hi].reshape(bt, seq, hd)
        s = jnp.einsum("bqd,bkd->bqk", qh, kh, preferred_element_type=jnp.float32)
        s = s - jnp.max(s, axis=-1, keepdims=True)
        p = jnp.exp(s)
        p = p * pl.reciprocal(jnp.sum(p, axis=-1, keepdims=True), approx=approx_recip)
        ctx_h = jnp.einsum("bqk,bkd->bqd", p.astype(cdt), vh,
                           preferred_element_type=jnp.float32)
        ctx_ref[:, lo:hi] = ctx_h.reshape(M, hd)

    # Single output projection over the full (M, E) context.
    attn = jnp.dot(ctx_ref[...].astype(cdt), wo_ref[...],
                   preferred_element_type=jnp.float32) + bo_ref[...]

    # --- residual + LayerNorm 1 (f32) ---
    y = _layernorm(x + attn, g1_ref[...], be1_ref[...])

    # --- feed-forward over all bt*seq rows ---
    # TODO(synk): for large dim_feedforward, stream w1/w2 in F-chunks via a
    # reduction grid axis or pltpu.emit_pipeline instead of keeping them resident.
    h1 = jnp.maximum(
        jnp.dot(y.astype(cdt), w1_ref[...],
                preferred_element_type=jnp.float32) + b1_ref[...], 0.0)
    ff = jnp.dot(h1.astype(cdt), w2_ref[...],
                 preferred_element_type=jnp.float32) + b2_ref[...]

    # --- residual + LayerNorm 2 (f32) ---
    o_ref[...] = _layernorm(y + ff, g2_ref[...], be2_ref[...]).reshape(bt, seq, E)


def _tpu_generation():
    """Best-effort (vmem_capacity_bytes, device_kind) query; safe fallbacks."""
    kind = ""
    try:
        kind = jax.devices()[0].device_kind.lower()
    except Exception:
        pass
    vmem_cap = None
    try:
        info_fn = getattr(pltpu, "get_tpu_info", None)
        if info_fn is not None:
            vmem_cap = int(info_fn().vmem_capacity_bytes)
    except Exception:
        vmem_cap = None
    if vmem_cap is None or vmem_cap <= 0:
        vmem_cap = (64 << 20) if "v7" in kind else (128 << 20)
    return vmem_cap, kind


def _choose_batch_tile(B, S, *, row_target, two_steps, per_batch_act_bytes, act_budget):
    """Pick bt: fill ~row_target matmul rows, fit the VMEM activation budget,
    and (v7x only) keep >= 2 grid steps so both TensorCores get work."""
    divisors = [d for d in range(1, B + 1) if B % d == 0]
    fit = [d for d in divisors if d * per_batch_act_bytes <= act_budget] or [1]
    target = max(1, row_target // max(S, 1))
    cands = [d for d in fit if d <= target] or [min(fit)]
    if two_steps:
        two = [d for d in cands if B // d >= 2]
        cands = two or cands
    return max(cands)


def transformer_block(src, params, nhead, *, compute_dtype=jnp.bfloat16):
    """src: (S, B, E) float32 -> (S, B, E) float32."""
    S, B, E = src.shape
    assert E % nhead == 0, "d_model must be divisible by nhead"
    hd = E // nhead
    scale = 1.0 / (hd ** 0.5)
    cdt = jnp.dtype(compute_dtype)
    f32 = jnp.float32
    cb = cdt.itemsize

    x = jnp.transpose(src, (1, 0, 2)).astype(f32)          # (B, S, E)

    # Host-side weight prep: pre-transpose, fuse QKV, fold the softmax scale
    # into the Wq / bq columns, cast matmul weights to the compute dtype
    # (biases / LN params stay f32).
    wqkv = jnp.concatenate(
        [params["wq"].T * scale, params["wk"].T, params["wv"].T], axis=1).astype(cdt)
    bqkv = jnp.concatenate(
        [params["bq"] * scale, params["bk"], params["bv"]], axis=1).astype(f32)
    weights = [
        wqkv,                                   # (E, 3E)
        bqkv,                                   # (1, 3E)
        params["wo"].T.astype(cdt),             # (E, E)
        params["bo"].astype(f32),               # (1, E)
        params["w1"].T.astype(cdt),             # (E, F)
        params["b1"].astype(f32),               # (1, F)
        params["w2"].T.astype(cdt),             # (F, E)
        params["b2"].astype(f32),               # (1, E)
        params["g1"].astype(f32), params["be1"].astype(f32),
        params["g2"].astype(f32), params["be2"].astype(f32),
    ]
    F = weights[4].shape[1]                     # dim_feedforward

    vmem_cap, kind = _tpu_generation()
    two_steps = "v7" in kind                    # only v7x has 2 TCs for the parallel axis
    row_target = 512 if "v6" in kind else 256   # v6e: 2x256 MXU; v5e/v7x/unknown: ~256 rows

    w_bytes = sum(int(w.size) * w.dtype.itemsize for w in weights)
    # Per-batch-element activation footprint: f32 residual stream + compute-
    # dtype copies, fused qkv, ctx scratch / attn / y / ff / out, FFN hidden
    # (f32 + compute dtype), per-head (S,S) score+prob tiles (Python loop does
    # not bound live ranges), and double-buffered I/O blocks.
    per_b_act = S * (E * (4 + cb)               # x + xc
                     + 3 * E * (4 + cb)         # qkv f32 + q/k/v compute copies
                     + 6 * E * 4                # ctx scratch, attn, y, ff, out, slack
                     + F * (4 + cb)             # h1 f32 + compute copy
                     + 4 * E * 4                # double-buffered in/out blocks
                     ) + 2 * nhead * S * S * 4  # score + prob tiles
    act_budget = max(4 << 20, int(0.6 * vmem_cap) - w_bytes)

    bt = _choose_batch_tile(B, S, row_target=row_target, two_steps=two_steps,
                            per_batch_act_bytes=per_b_act, act_budget=act_budget)
    grid = (B // bt,)

    def const_map(ndim):
        return lambda i, _n=ndim: (0,) * _n

    in_specs = [pl.BlockSpec((bt, S, E), lambda i: (i, 0, 0))]
    in_specs += [
        pl.BlockSpec(w.shape, const_map(w.ndim), pipeline_mode=pl.Buffered(1))
        for w in weights
    ]
    out_specs = pl.BlockSpec((bt, S, E), lambda i: (i, 0, 0))

    # Scoped VMEM limit: below physical per-core VMEM with headroom for
    # internal scratch (48 MiB cap on v7x's 64 MiB, up to 112 MiB on v5e/v6e).
    budget_cap = max(32 << 20, vmem_cap - (16 << 20))
    vmem_limit = int(min(budget_cap,
                         max(32 << 20, int(1.5 * (w_bytes + bt * per_b_act)))))

    out = pl.pallas_call(
        functools.partial(
            _tb_kernel, nhead=nhead, bt=bt, seq=S,
            approx_recip=bool(cdt == jnp.dtype(jnp.bfloat16))),
        out_shape=jax.ShapeDtypeStruct((B, S, E), f32),
        grid=grid,
        in_specs=in_specs,
        out_specs=out_specs,
        scratch_shapes=[pltpu.VMEM((bt * S, E), jnp.float32)],   # per-head ctx buffer
        compiler_params=pltpu.CompilerParams(
            dimension_semantics=("parallel",),
            vmem_limit_bytes=vmem_limit),
    )(x, *weights)

    return jnp.transpose(out, (1, 0, 2))        # back to (S, B, E)


def init_params(key, d_model, nhead, dim_feedforward):
    ks = jax.random.split(key, 12)
    E, F = d_model, dim_feedforward
    s = 0.05
    p = {
        # attention in-projection (PyTorch packs these as in_proj_weight (3E,E))
        "wq": s * jax.random.normal(ks[0], (E, E), jnp.float32),
        "wk": s * jax.random.normal(ks[1], (E, E), jnp.float32),
        "wv": s * jax.random.normal(ks[2], (E, E), jnp.float32),
        "bq": s * jax.random.normal(ks[3], (1, E), jnp.float32),
        "bk": s * jax.random.normal(ks[4], (1, E), jnp.float32),
        "bv": s * jax.random.normal(ks[5], (1, E), jnp.float32),
        # attention output projection
        "wo": s * jax.random.normal(ks[6], (E, E), jnp.float32),
        "bo": s * jax.random.normal(ks[7], (1, E), jnp.float32),
        # FFN
        "w1": s * jax.random.normal(ks[8], (F, E), jnp.float32),
        "b1": s * jax.random.normal(ks[9], (1, F), jnp.float32),
        "w2": s * jax.random.normal(ks[10], (E, F), jnp.float32),
        "b2": s * jax.random.normal(ks[11], (1, E), jnp.float32),
        # LayerNorms
        "g1": jnp.ones((1, E), jnp.float32),
        "be1": jnp.zeros((1, E), jnp.float32),
        "g2": jnp.ones((1, E), jnp.float32),
        "be2": jnp.zeros((1, E), jnp.float32),
    }
    return p


def reference_block(src, params, nhead):
    """Pure-JAX f32 reference mirroring PyTorch semantics (dropout = identity)."""
    S, B, E = src.shape
    hd = E // nhead
    scale = 1.0 / (hd ** 0.5)
    x = jnp.transpose(src, (1, 0, 2))           # (B, S, E)

    q = x @ params["wq"].T + params["bq"]
    k = x @ params["wk"].T + params["bk"]
    v = x @ params["wv"].T + params["bv"]

    def split(t):  # (B,S,E) -> (B,H,S,hd)
        return jnp.transpose(t.reshape(B, S, nhead, hd), (0, 2, 1, 3))

    qh, kh, vh = split(q) * scale, split(k), split(v)
    s = jnp.einsum("bhqd,bhkd->bhqk", qh, kh)
    p = jax.nn.softmax(s, axis=-1)
    ctx = jnp.einsum("bhqk,bhkd->bhqd", p, vh)
    ctx = jnp.transpose(ctx, (0, 2, 1, 3)).reshape(B, S, E)
    attn = ctx @ params["wo"].T + params["bo"]

    def ln(t, g, b):
        mu = jnp.mean(t, -1, keepdims=True)
        var = jnp.mean((t - mu) ** 2, -1, keepdims=True)
        return (t - mu) / jnp.sqrt(var + EPS) * g + b

    y = ln(x + attn, params["g1"], params["be1"])
    ff = jnp.maximum(y @ params["w1"].T + params["b1"], 0.0) @ params["w2"].T + params["b2"]
    z = ln(y + ff, params["g2"], params["be2"])
    return jnp.transpose(z, (1, 0, 2))


if __name__ == "__main__":
    S, B = 8, 2
    d_model, nhead, dim_feedforward = 32, 4, 64

    key = jax.random.PRNGKey(0)
    k_src, k_par = jax.random.split(key)
    src = jax.random.normal(k_src, (S, B, d_model), jnp.float32)
    params = init_params(k_par, d_model, nhead, dim_feedforward)

    ref = reference_block(src, params, nhead)

    # f32 compute path: tight check against the PyTorch-semantics reference.
    out_f32 = jax.block_until_ready(
        transformer_block(src, params, nhead, compute_dtype=jnp.float32))
    assert out_f32.shape == (S, B, d_model)
    assert jnp.allclose(out_f32, ref, atol=1e-4, rtol=1e-4), "f32 mismatch vs reference"

    # bf16 (default / performance) path: f32 accumulation + f32 softmax/LN.
    # Note: pl.reciprocal(approx=True) means softmax rows sum to ~1 (not exactly 1);
    # the error is well inside the bf16 tolerance below.
    out_bf16 = jax.block_until_ready(transformer_block(src, params, nhead))
    assert out_bf16.shape == (S, B, d_model)
    assert jnp.allclose(out_bf16, ref, atol=2e-2, rtol=2e-2), "bf16 mismatch vs reference"

    print("KERNEL_OK")
</pallas_src>

<mosaic_0001>
module attributes {stable_mosaic.version = 11 : i64} {
  func.func @_tb_kernel(%arg0: i32, %arg1: memref<2x8x32xf32, #tpu.memory_space<vmem>>, %arg2: memref<32x96xf32, #tpu.memory_space<vmem>>, %arg3: memref<1x96xf32, #tpu.memory_space<vmem>>, %arg4: memref<32x32xf32, #tpu.memory_space<vmem>>, %arg5: memref<1x32xf32, #tpu.memory_space<vmem>>, %arg6: memref<32x64xf32, #tpu.memory_space<vmem>>, %arg7: memref<1x64xf32, #tpu.memory_space<vmem>>, %arg8: memref<64x32xf32, #tpu.memory_space<vmem>>, %arg9: memref<1x32xf32, #tpu.memory_space<vmem>>, %arg10: memref<1x32xf32, #tpu.memory_space<vmem>>, %arg11: memref<1x32xf32, #tpu.memory_space<vmem>>, %arg12: memref<1x32xf32, #tpu.memory_space<vmem>>, %arg13: memref<1x32xf32, #tpu.memory_space<vmem>>, %arg14: memref<2x8x32xf32, #tpu.memory_space<vmem>>, %arg15: memref<16x32xf32, #tpu.memory_space<vmem>>) attributes {dimension_semantics = [#tpu.dimension_semantics<parallel>], iteration_bounds = array<i64: 1>, scalar_prefetch = 0 : i64, scratch_operands = 1 : i64, tpu.core_type = #tpu.core_type<tc>, window_params = [{transform_indices = @transform_0, window_bounds = array<i64: 2, 8, 32>}, {pipeline_mode = #tpu.pipeline_mode<synchronous>, transform_indices = @transform_1, window_bounds = array<i64: 32, 96>}, {pipeline_mode = #tpu.pipeline_mode<synchronous>, transform_indices = @transform_2, window_bounds = array<i64: 1, 96>}, {pipeline_mode = #tpu.pipeline_mode<synchronous>, transform_indices = @transform_3, window_bounds = array<i64: 32, 32>}, {pipeline_mode = #tpu.pipeline_mode<synchronous>, transform_indices = @transform_4, window_bounds = array<i64: 1, 32>}, {pipeline_mode = #tpu.pipeline_mode<synchronous>, transform_indices = @transform_5, window_bounds = array<i64: 32, 64>}, {pipeline_mode = #tpu.pipeline_mode<synchronous>, transform_indices = @transform_6, window_bounds = array<i64: 1, 64>}, {pipeline_mode = #tpu.pipeline_mode<synchronous>, transform_indices = @transform_7, window_bounds = array<i64: 64, 32>}, {pipeline_mode = #tpu.pipeline_mode<synchronous>, transform_indices = @transform_8, window_bounds = array<i64: 1, 32>}, {pipeline_mode = #tpu.pipeline_mode<synchronous>, transform_indices = @transform_9, window_bounds = array<i64: 1, 32>}, {pipeline_mode = #tpu.pipeline_mode<synchronous>, transform_indices = @transform_10, window_bounds = array<i64: 1, 32>}, {pipeline_mode = #tpu.pipeline_mode<synchronous>, transform_indices = @transform_11, window_bounds = array<i64: 1, 32>}, {pipeline_mode = #tpu.pipeline_mode<synchronous>, transform_indices = @transform_12, window_bounds = array<i64: 1, 32>}, {transform_indices = @transform_13, window_bounds = array<i64: 2, 8, 32>}]} {
    %c0 = arith.constant 0 : index
    %c0_0 = arith.constant 0 : index
    %c0_1 = arith.constant 0 : index
    %0 = vector.load %arg1[%c0, %c0_0, %c0_1] : memref<2x8x32xf32, #tpu.memory_space<vmem>>, vector<2x8x32xf32>
    %1 = vector.shape_cast %0 : vector<2x8x32xf32> to vector<16x32xf32>
    %c0_2 = arith.constant 0 : index
    %c0_3 = arith.constant 0 : index
    %2 = vector.load %arg2[%c0_2, %c0_3] : memref<32x96xf32, #tpu.memory_space<vmem>>, vector<32x96xf32>
    %cst = arith.constant dense<0.000000e+00> : vector<16x96xf32>
    %3 = tpu.matmul %1, %2, %cst {dimension_numbers = #tpu.dot_dimension_numbers<[1], [0], [0], [1], [0, 0, 1, 1], [], []>} : vector<16x32xf32>, vector<32x96xf32>, vector<16x96xf32> -> vector<16x96xf32>
    %c0_4 = arith.constant 0 : index
    %c0_5 = arith.constant 0 : index
    %4 = vector.load %arg3[%c0_4, %c0_5] : memref<1x96xf32, #tpu.memory_space<vmem>>, vector<1x96xf32>
    %5 = vector.broadcast %4 : vector<1x96xf32> to vector<16x96xf32>
    %6 = arith.addf %3, %5 : vector<16x96xf32>
    %7 = vector.extract_strided_slice %6 {offsets = [0, 0], sizes = [16, 32], strides = [1, 1]} : vector<16x96xf32> to vector<16x32xf32>
    %8 = vector.extract_strided_slice %6 {offsets = [0, 32], sizes = [16, 32], strides = [1, 1]} : vector<16x96xf32> to vector<16x32xf32>
    %9 = vector.extract_strided_slice %6 {offsets = [0, 64], sizes = [16, 32], strides = [1, 1]} : vector<16x96xf32> to vector<16x32xf32>
    %10 = vector.extract_strided_slice %7 {offsets = [0, 0], sizes = [16, 8], strides = [1, 1]} : vector<16x32xf32> to vector<16x8xf32>
    %11 = vector.shape_cast %10 : vector<16x8xf32> to vector<2x8x8xf32>
    %12 = vector.extract_strided_slice %8 {offsets = [0, 0], sizes = [16, 8], strides = [1, 1]} : vector<16x32xf32> to vector<16x8xf32>
    %13 = vector.shape_cast %12 : vector<16x8xf32> to vector<2x8x8xf32>
    %14 = vector.extract_strided_slice %9 {offsets = [0, 0], sizes = [16, 8], strides = [1, 1]} : vector<16x32xf32> to vector<16x8xf32>
    %15 = vector.shape_cast %14 : vector<16x8xf32> to vector<2x8x8xf32>
    "tpu.trace_start"() <{level = 10 : i32, message = "bqd,bkd->bqk"}> : () -> ()
    %cst_6 = arith.constant dense<0.000000e+00> : vector<2x8x8xf32>
    %16 = tpu.matmul %11, %13, %cst_6 {dimension_numbers = #tpu.dot_dimension_numbers<[2], [2], [1], [1], [0, 0, 0, 1, 1, 1], [0], [0]>} : vector<2x8x8xf32>, vector<2x8x8xf32>, vector<2x8x8xf32> -> vector<2x8x8xf32>
    "tpu.trace_stop"() : () -> ()
    %cst_7 = arith.constant dense<0xFF800000> : vector<2x8xf32>
    %17 = vector.multi_reduction <maximumf>, %16, %cst_7 [2] : vector<2x8x8xf32> to vector<2x8xf32>
    %18 = vector.shape_cast %17 : vector<2x8xf32> to vector<2x8x1xf32>
    %19 = vector.broadcast %18 : vector<2x8x1xf32> to vector<2x8x8xf32>
    %20 = arith.subf %16, %19 : vector<2x8x8xf32>
    %21 = math.exp %20 : vector<2x8x8xf32>
    %cst_8 = arith.constant dense<0.000000e+00> : vector<2x8xf32>
    %22 = vector.multi_reduction <add>, %21, %cst_8 [2] : vector<2x8x8xf32> to vector<2x8xf32>
    %23 = vector.shape_cast %22 : vector<2x8xf32> to vector<2x8x1xf32>
    %24 = tpu.reciprocal %23 : vector<2x8x1xf32> -> vector<2x8x1xf32>
    %25 = vector.broadcast %24 : vector<2x8x1xf32> to vector<2x8x8xf32>
    %26 = arith.mulf %21, %25 : vector<2x8x8xf32>
    "tpu.trace_start"() <{level = 10 : i32, message = "bqk,bkd->bqd"}> : () -> ()
    %cst_9 = arith.constant dense<0.000000e+00> : vector<2x8x8xf32>
    %27 = tpu.matmul %26, %15, %cst_9 {dimension_numbers = #tpu.dot_dimension_numbers<[2], [1], [1], [2], [0, 0, 0, 1, 1, 2], [0], [0]>} : vector<2x8x8xf32>, vector<2x8x8xf32>, vector<2x8x8xf32> -> vector<2x8x8xf32>
    "tpu.trace_stop"() : () -> ()
    %28 = vector.shape_cast %27 : vector<2x8x8xf32> to vector<16x8xf32>
    %c0_10 = arith.constant 0 : index
    %c0_11 = arith.constant 0 : index
    %29 = vector.load %arg15[%c0_10, %c0_11] : memref<16x32xf32, #tpu.memory_space<vmem>>, vector<16x8xf32>
    tpu.vector_store %arg15[%c0_10, %c0_11], %28 {strides = array<i32>} : memref<16x32xf32, #tpu.memory_space<vmem>>, vector<16x8xf32>,
    %30 = vector.extract_strided_slice %7 {offsets = [0, 8], sizes = [16, 8], strides = [1, 1]} : vector<16x32xf32> to vector<16x8xf32>
    %31 = vector.shape_cast %30 : vector<16x8xf32> to vector<2x8x8xf32>
    %32 = vector.extract_strided_slice %8 {offsets = [0, 8], sizes = [16, 8], strides = [1, 1]} : vector<16x32xf32> to vector<16x8xf32>
    %33 = vector.shape_cast %32 : vector<16x8xf32> to vector<2x8x8xf32>
    %34 = vector.extract_strided_slice %9 {offsets = [0, 8], sizes = [16, 8], strides = [1, 1]} : vector<16x32xf32> to vector<16x8xf32>
    %35 = vector.shape_cast %34 : vector<16x8xf32> to vector<2x8x8xf32>
    "tpu.trace_start"() <{level = 10 : i32, message = "bqd,bkd->bqk"}> : () -> ()
    %cst_12 = arith.constant dense<0.000000e+00> : vector<2x8x8xf32>
    %36 = tpu.matmul %31, %33, %cst_12 {dimension_numbers = #tpu.dot_dimension_numbers<[2], [2], [1], [1], [0, 0, 0, 1, 1, 1], [0], [0]>} : vector<2x8x8xf32>, vector<2x8x8xf32>, vector<2x8x8xf32> -> vector<2x8x8xf32>
    "tpu.trace_stop"() : () -> ()
    %cst_13 = arith.constant dense<0xFF800000> : vector<2x8xf32>
    %37 = vector.multi_reduction <maximumf>, %36, %cst_13 [2] : vector<2x8x8xf32> to vector<2x8xf32>
    %38 = vector.shape_cast %37 : vector<2x8xf32> to vector<2x8x1xf32>
    %39 = vector.broadcast %38 : vector<2x8x1xf32> to vector<2x8x8xf32>
    %40 = arith.subf %36, %39 : vector<2x8x8xf32>
    %41 = math.exp %40 : vector<2x8x8xf32>
    %cst_14 = arith.constant dense<0.000000e+00> : vector<2x8xf32>
    %42 = vector.multi_reduction <add>, %41, %cst_14 [2] : vector<2x8x8xf32> to vector<2x8xf32>
    %43 = vector.shape_cast %42 : vector<2x8xf32> to vector<2x8x1xf32>
    %44 = tpu.reciprocal %43 : vector<2x8x1xf32> -> vector<2x8x1xf32>
    %45 = vector.broadcast %44 : vector<2x8x1xf32> to vector<2x8x8xf32>
    %46 = arith.mulf %41, %45 : vector<2x8x8xf32>
    "tpu.trace_start"() <{level = 10 : i32, message = "bqk,bkd->bqd"}> : () -> ()
    %cst_15 = arith.constant dense<0.000000e+00> : vector<2x8x8xf32>
    %47 = tpu.matmul %46, %35, %cst_15 {dimension_numbers = #tpu.dot_dimension_numbers<[2], [1], [1], [2], [0, 0, 0, 1, 1, 2], [0], [0]>} : vector<2x8x8xf32>, vector<2x8x8xf32>, vector<2x8x8xf32> -> vector<2x8x8xf32>
    "tpu.trace_stop"() : () -> ()
    %48 = vector.shape_cast %47 : vector<2x8x8xf32> to vector<16x8xf32>
    %c0_16 = arith.constant 0 : index
    %c8 = arith.constant 8 : index
    %49 = vector.load %arg15[%c0_16, %c8] : memref<16x32xf32, #tpu.memory_space<vmem>>, vector<16x8xf32>
    tpu.vector_store %arg15[%c0_16, %c8], %48 {strides = array<i32>} : memref<16x32xf32, #tpu.memory_space<vmem>>, vector<16x8xf32>,
    %50 = vector.extract_strided_slice %7 {offsets = [0, 16], sizes = [16, 8], strides = [1, 1]} : vector<16x32xf32> to vector<16x8xf32>
    %51 = vector.shape_cast %50 : vector<16x8xf32> to vector<2x8x8xf32>
    %52 = vector.extract_strided_slice %8 {offsets = [0, 16], sizes = [16, 8], strides = [1, 1]} : vector<16x32xf32> to vector<16x8xf32>
    %53 = vector.shape_cast %52 : vector<16x8xf32> to vector<2x8x8xf32>
    %54 = vector.extract_strided_slice %9 {offsets = [0, 16], sizes = [16, 8], strides = [1, 1]} : vector<16x32xf32> to vector<16x8xf32>
    %55 = vector.shape_cast %54 : vector<16x8xf32> to vector<2x8x8xf32>
    "tpu.trace_start"() <{level = 10 : i32, message = "bqd,bkd->bqk"}> : () -> ()
    %cst_17 = arith.constant dense<0.000000e+00> : vector<2x8x8xf32>
    %56 = tpu.matmul %51, %53, %cst_17 {dimension_numbers = #tpu.dot_dimension_numbers<[2], [2], [1], [1], [0, 0, 0, 1, 1, 1], [0], [0]>} : vector<2x8x8xf32>, vector<2x8x8xf32>, vector<2x8x8xf32> -> vector<2x8x8xf32>
    "tpu.trace_stop"() : () -> ()
    %cst_18 = arith.constant dense<0xFF800000> : vector<2x8xf32>
    %57 = vector.multi_reduction <maximumf>, %56, %cst_18 [2] : vector<2x8x8xf32> to vector<2x8xf32>
    %58 = vector.shape_cast %57 : vector<2x8xf32> to vector<2x8x1xf32>
    %59 = vector.broadcast %58 : vector<2x8x1xf32> to vector<2x8x8xf32>
    %60 = arith.subf %56, %59 : vector<2x8x8xf32>
    %61 = math.exp %60 : vector<2x8x8xf32>
    %cst_19 = arith.constant dense<0.000000e+00> : vector<2x8xf32>
    %62 = vector.multi_reduction <add>, %61, %cst_19 [2] : vector<2x8x8xf32> to vector<2x8xf32>
    %63 = vector.shape_cast %62 : vector<2x8xf32> to vector<2x8x1xf32>
    %64 = tpu.reciprocal %63 : vector<2x8x1xf32> -> vector<2x8x1xf32>
    %65 = vector.broadcast %64 : vector<2x8x1xf32> to vector<2x8x8xf32>
    %66 = arith.mulf %61, %65 : vector<2x8x8xf32>
    "tpu.trace_start"() <{level = 10 : i32, message = "bqk,bkd->bqd"}> : () -> ()
    %cst_20 = arith.constant dense<0.000000e+00> : vector<2x8x8xf32>
    %67 = tpu.matmul %66, %55, %cst_20 {dimension_numbers = #tpu.dot_dimension_numbers<[2], [1], [1], [2], [0, 0, 0, 1, 1, 2], [0], [0]>} : vector<2x8x8xf32>, vector<2x8x8xf32>, vector<2x8x8xf32> -> vector<2x8x8xf32>
    "tpu.trace_stop"() : () -> ()
    %68 = vector.shape_cast %67 : vector<2x8x8xf32> to vector<16x8xf32>
    %c0_21 = arith.constant 0 : index
    %c16 = arith.constant 16 : index
    %69 = vector.load %arg15[%c0_21, %c16] : memref<16x32xf32, #tpu.memory_space<vmem>>, vector<16x8xf32>
    tpu.vector_store %arg15[%c0_21, %c16], %68 {strides = array<i32>} : memref<16x32xf32, #tpu.memory_space<vmem>>, vector<16x8xf32>,
    %70 = vector.extract_strided_slice %7 {offsets = [0, 24], sizes = [16, 8], strides = [1, 1]} : vector<16x32xf32> to vector<16x8xf32>
    %71 = vector.shape_cast %70 : vector<16x8xf32> to vector<2x8x8xf32>
    %72 = vector.extract_strided_slice %8 {offsets = [0, 24], sizes = [16, 8], strides = [1, 1]} : vector<16x32xf32> to vector<16x8xf32>
    %73 = vector.shape_cast %72 : vector<16x8xf32> to vector<2x8x8xf32>
    %74 = vector.extract_strided_slice %9 {offsets = [0, 24], sizes = [16, 8], strides = [1, 1]} : vector<16x32xf32> to vector<16x8xf32>
    %75 = vector.shape_cast %74 : vector<16x8xf32> to vector<2x8x8xf32>
    "tpu.trace_start"() <{level = 10 : i32, message = "bqd,bkd->bqk"}> : () -> ()
    %cst_22 = arith.constant dense<0.000000e+00> : vector<2x8x8xf32>
    %76 = tpu.matmul %71, %73, %cst_22 {dimension_numbers = #tpu.dot_dimension_numbers<[2], [2], [1], [1], [0, 0, 0, 1, 1, 1], [0], [0]>} : vector<2x8x8xf32>, vector<2x8x8xf32>, vector<2x8x8xf32> -> vector<2x8x8xf32>
    "tpu.trace_stop"() : () -> ()
    %cst_23 = arith.constant dense<0xFF800000> : vector<2x8xf32>
    %77 = vector.multi_reduction <maximumf>, %76, %cst_23 [2] : vector<2x8x8xf32> to vector<2x8xf32>
    %78 = vector.shape_cast %77 : vector<2x8xf32> to vector<2x8x1xf32>
    %79 = vector.broadcast %78 : vector<2x8x1xf32> to vector<2x8x8xf32>
    %80 = arith.subf %76, %79 : vector<2x8x8xf32>
    %81 = math.exp %80 : vector<2x8x8xf32>
    %cst_24 = arith.constant dense<0.000000e+00> : vector<2x8xf32>
    %82 = vector.multi_reduction <add>, %81, %cst_24 [2] : vector<2x8x8xf32> to vector<2x8xf32>
    %83 = vector.shape_cast %82 : vector<2x8xf32> to vector<2x8x1xf32>
    %84 = tpu.reciprocal %83 : vector<2x8x1xf32> -> vector<2x8x1xf32>
    %85 = vector.broadcast %84 : vector<2x8x1xf32> to vector<2x8x8xf32>
    %86 = arith.mulf %81, %85 : vector<2x8x8xf32>
    "tpu.trace_start"() <{level = 10 : i32, message = "bqk,bkd->bqd"}> : () -> ()
    %cst_25 = arith.constant dense<0.000000e+00> : vector<2x8x8xf32>
    %87 = tpu.matmul %86, %75, %cst_25 {dimension_numbers = #tpu.dot_dimension_numbers<[2], [1], [1], [2], [0, 0, 0, 1, 1, 2], [0], [0]>} : vector<2x8x8xf32>, vector<2x8x8xf32>, vector<2x8x8xf32> -> vector<2x8x8xf32>
    "tpu.trace_stop"() : () -> ()
    %88 = vector.shape_cast %87 : vector<2x8x8xf32> to vector<16x8xf32>
    %c0_26 = arith.constant 0 : index
    %c24 = arith.constant 24 : index
    %89 = vector.load %arg15[%c0_26, %c24] : memref<16x32xf32, #tpu.memory_space<vmem>>, vector<16x8xf32>
    tpu.vector_store %arg15[%c0_26, %c24], %88 {strides = array<i32>} : memref<16x32xf32, #tpu.memory_space<vmem>>, vector<16x8xf32>,
    %c0_27 = arith.constant 0 : index
    %c0_28 = arith.constant 0 : index
    %90 = vector.load %arg15[%c0_27, %c0_28] : memref<16x32xf32, #tpu.memory_space<vmem>>, vector<16x32xf32>
    %c0_29 = arith.constant 0 : index
    %c0_30 = arith.constant 0 : index
    %91 = vector.load %arg4[%c0_29, %c0_30] : memref<32x32xf32, #tpu.memory_space<vmem>>, vector<32x32xf32>
    %cst_31 = arith.constant dense<0.000000e+00> : vector<16x32xf32>
    %92 = tpu.matmul %90, %91, %cst_31 {dimension_numbers = #tpu.dot_dimension_numbers<[1], [0], [0], [1], [0, 0, 1, 1], [], []>} : vector<16x32xf32>, vector<32x32xf32>, vector<16x32xf32> -> vector<16x32xf32>
    %c0_32 = arith.constant 0 : index
    %c0_33 = arith.constant 0 : index
    %93 = vector.load %arg5[%c0_32, %c0_33] : memref<1x32xf32, #tpu.memory_space<vmem>>, vector<1x32xf32>
    %94 = vector.broadcast %93 : vector<1x32xf32> to vector<16x32xf32>
    %95 = arith.addf %92, %94 : vector<16x32xf32>
    %96 = arith.addf %1, %95 : vector<16x32xf32>
    %c0_34 = arith.constant 0 : index
    %c0_35 = arith.constant 0 : index
    %97 = vector.load %arg10[%c0_34, %c0_35] : memref<1x32xf32, #tpu.memory_space<vmem>>, vector<1x32xf32>
    %c0_36 = arith.constant 0 : index
    %c0_37 = arith.constant 0 : index
    %98 = vector.load %arg11[%c0_36, %c0_37] : memref<1x32xf32, #tpu.memory_space<vmem>>, vector<1x32xf32>
    %cst_38 = arith.constant dense<0.000000e+00> : vector<16xf32>
    %99 = vector.multi_reduction <add>, %96, %cst_38 [1] : vector<16x32xf32> to vector<16xf32>
    %100 = vector.shape_cast %99 : vector<16xf32> to vector<16x1xf32>
    %cst_39 = arith.constant 3.200000e+01 : f32
    %101 = vector.broadcast %cst_39 : f32 to vector<16x1xf32>
    %102 = arith.divf %100, %101 : vector<16x1xf32>
    %103 = vector.broadcast %102 : vector<16x1xf32> to vector<16x32xf32>
    %104 = arith.subf %96, %103 : vector<16x32xf32>
    %105 = vector.broadcast %102 : vector<16x1xf32> to vector<16x32xf32>
    %106 = arith.subf %96, %105 : vector<16x32xf32>
    %107 = arith.mulf %104, %106 : vector<16x32xf32>
    %cst_40 = arith.constant dense<0.000000e+00> : vector<16xf32>
    %108 = vector.multi_reduction <add>, %107, %cst_40 [1] : vector<16x32xf32> to vector<16xf32>
    %109 = vector.shape_cast %108 : vector<16xf32> to vector<16x1xf32>
    %cst_41 = arith.constant 3.200000e+01 : f32
    %110 = vector.broadcast %cst_41 : f32 to vector<16x1xf32>
    %111 = arith.divf %109, %110 : vector<16x1xf32>
    %112 = vector.broadcast %102 : vector<16x1xf32> to vector<16x32xf32>
    %113 = arith.subf %96, %112 : vector<16x32xf32>
    %cst_42 = arith.constant 9.99999974E-6 : f32
    %114 = vector.broadcast %cst_42 : f32 to vector<16x1xf32>
    %115 = arith.addf %111, %114 : vector<16x1xf32>
    %116 = math.rsqrt %115 : vector<16x1xf32>
    %117 = vector.broadcast %116 : vector<16x1xf32> to vector<16x32xf32>
    %118 = arith.mulf %113, %117 : vector<16x32xf32>
    %119 = vector.broadcast %97 : vector<1x32xf32> to vector<16x32xf32>
    %120 = arith.mulf %118, %119 : vector<16x32xf32>
    %121 = vector.broadcast %98 : vector<1x32xf32> to vector<16x32xf32>
    %122 = arith.addf %120, %121 : vector<16x32xf32>
    %c0_43 = arith.constant 0 : index
    %c0_44 = arith.constant 0 : index
    %123 = vector.load %arg6[%c0_43, %c0_44] : memref<32x64xf32, #tpu.memory_space<vmem>>, vector<32x64xf32>
    %cst_45 = arith.constant dense<0.000000e+00> : vector<16x64xf32>
    %124 = tpu.matmul %122, %123, %cst_45 {dimension_numbers = #tpu.dot_dimension_numbers<[1], [0], [0], [1], [0, 0, 1, 1], [], []>} : vector<16x32xf32>, vector<32x64xf32>, vector<16x64xf32> -> vector<16x64xf32>
    %c0_46 = arith.constant 0 : index
    %c0_47 = arith.constant 0 : index
    %125 = vector.load %arg7[%c0_46, %c0_47] : memref<1x64xf32, #tpu.memory_space<vmem>>, vector<1x64xf32>
    %126 = vector.broadcast %125 : vector<1x64xf32> to vector<16x64xf32>
    %127 = arith.addf %124, %126 : vector<16x64xf32>
    %cst_48 = arith.constant 0.000000e+00 : f32
    %128 = vector.broadcast %cst_48 : f32 to vector<16x64xf32>
    %129 = arith.maximumf %127, %128 : vector<16x64xf32>
    %c0_49 = arith.constant 0 : index
    %c0_50 = arith.constant 0 : index
    %130 = vector.load %arg8[%c0_49, %c0_50] : memref<64x32xf32, #tpu.memory_space<vmem>>, vector<64x32xf32>
    %cst_51 = arith.constant dense<0.000000e+00> : vector<16x32xf32>
    %131 = tpu.matmul %129, %130, %cst_51 {dimension_numbers = #tpu.dot_dimension_numbers<[1], [0], [0], [1], [0, 0, 1, 1], [], []>} : vector<16x64xf32>, vector<64x32xf32>, vector<16x32xf32> -> vector<16x32xf32>
    %c0_52 = arith.constant 0 : index
    %c0_53 = arith.constant 0 : index
    %132 = vector.load %arg9[%c0_52, %c0_53] : memref<1x32xf32, #tpu.memory_space<vmem>>, vector<1x32xf32>
    %133 = vector.broadcast %132 : vector<1x32xf32> to vector<16x32xf32>
    %134 = arith.addf %131, %133 : vector<16x32xf32>
    %135 = arith.addf %122, %134 : vector<16x32xf32>
    %c0_54 = arith.constant 0 : index
    %c0_55 = arith.constant 0 : index
    %136 = vector.load %arg12[%c0_54, %c0_55] : memref<1x32xf32, #tpu.memory_space<vmem>>, vector<1x32xf32>
    %c0_56 = arith.constant 0 : index
    %c0_57 = arith.constant 0 : index
    %137 = vector.load %arg13[%c0_56, %c0_57] : memref<1x32xf32, #tpu.memory_space<vmem>>, vector<1x32xf32>
    %cst_58 = arith.constant dense<0.000000e+00> : vector<16xf32>
    %138 = vector.multi_reduction <add>, %135, %cst_58 [1] : vector<16x32xf32> to vector<16xf32>
    %139 = vector.shape_cast %138 : vector<16xf32> to vector<16x1xf32>
    %cst_59 = arith.constant 3.200000e+01 : f32
    %140 = vector.broadcast %cst_59 : f32 to vector<16x1xf32>
    %141 = arith.divf %139, %140 : vector<16x1xf32>
    %142 = vector.broadcast %141 : vector<16x1xf32> to vector<16x32xf32>
    %143 = arith.subf %135, %142 : vector<16x32xf32>
    %144 = vector.broadcast %141 : vector<16x1xf32> to vector<16x32xf32>
    %145 = arith.subf %135, %144 : vector<16x32xf32>
    %146 = arith.mulf %143, %145 : vector<16x32xf32>
    %cst_60 = arith.constant dense<0.000000e+00> : vector<16xf32>
    %147 = vector.multi_reduction <add>, %146, %cst_60 [1] : vector<16x32xf32> to vector<16xf32>
    %148 = vector.shape_cast %147 : vector<16xf32> to vector<16x1xf32>
    %cst_61 = arith.constant 3.200000e+01 : f32
    %149 = vector.broadcast %cst_61 : f32 to vector<16x1xf32>
    %150 = arith.divf %148, %149 : vector<16x1xf32>
    %151 = vector.broadcast %141 : vector<16x1xf32> to vector<16x32xf32>
    %152 = arith.subf %135, %151 : vector<16x32xf32>
    %cst_62 = arith.constant 9.99999974E-6 : f32
    %153 = vector.broadcast %cst_62 : f32 to vector<16x1xf32>
    %154 = arith.addf %150, %153 : vector<16x1xf32>
    %155 = math.rsqrt %154 : vector<16x1xf32>
    %156 = vector.broadcast %155 : vector<16x1xf32> to vector<16x32xf32>
    %157 = arith.mulf %152, %156 : vector<16x32xf32>
    %158 = vector.broadcast %136 : vector<1x32xf32> to vector<16x32xf32>
    %159 = arith.mulf %157, %158 : vector<16x32xf32>
    %160 = vector.broadcast %137 : vector<1x32xf32> to vector<16x32xf32>
    %161 = arith.addf %159, %160 : vector<16x32xf32>
    %162 = vector.shape_cast %161 : vector<16x32xf32> to vector<2x8x32xf32>
    %c0_63 = arith.constant 0 : index
    %c0_64 = arith.constant 0 : index
    %c0_65 = arith.constant 0 : index
    %163 = vector.load %arg14[%c0_63, %c0_64, %c0_65] : memref<2x8x32xf32, #tpu.memory_space<vmem>>, vector<2x8x32xf32>
    tpu.vector_store %arg14[%c0_63, %c0_64, %c0_65], %162 {strides = array<i32>} : memref<2x8x32xf32, #tpu.memory_space<vmem>>, vector<2x8x32xf32>,
    return
  }
  func.func @transform_0(%arg0: i32) -> (i32, i32, i32) {
    %c0_i32 = arith.constant 0 : i32
    %c0_i32_0 = arith.constant 0 : i32
    %c0_i32_1 = arith.constant 0 : i32
    return %arg0, %c0_i32, %c0_i32_0 : i32, i32, i32
  }
  func.func @transform_1(%arg0: i32) -> (i32, i32) {
    %c0_i32 = arith.constant 0 : i32
    %c0_i32_0 = arith.constant 0 : i32
    %c0_i32_1 = arith.constant 0 : i32
    return %c0_i32, %c0_i32_0 : i32, i32
  }
  func.func @transform_2(%arg0: i32) -> (i32, i32) {
    %c0_i32 = arith.constant 0 : i32
    %c0_i32_0 = arith.constant 0 : i32
    %c0_i32_1 = arith.constant 0 : i32
    return %c0_i32, %c0_i32_0 : i32, i32
  }
  func.func @transform_3(%arg0: i32) -> (i32, i32) {
    %c0_i32 = arith.constant 0 : i32
    %c0_i32_0 = arith.constant 0 : i32
    %c0_i32_1 = arith.constant 0 : i32
    return %c0_i32, %c0_i32_0 : i32, i32
  }
  func.func @transform_4(%arg0: i32) -> (i32, i32) {
    %c0_i32 = arith.constant 0 : i32
    %c0_i32_0 = arith.constant 0 : i32
    %c0_i32_1 = arith.constant 0 : i32
    return %c0_i32, %c0_i32_0 : i32, i32
  }
  func.func @transform_5(%arg0: i32) -> (i32, i32) {
    %c0_i32 = arith.constant 0 : i32
    %c0_i32_0 = arith.constant 0 : i32
    %c0_i32_1 = arith.constant 0 : i32
    return %c0_i32, %c0_i32_0 : i32, i32
  }
  func.func @transform_6(%arg0: i32) -> (i32, i32) {
    %c0_i32 = arith.constant 0 : i32
    %c0_i32_0 = arith.constant 0 : i32
    %c0_i32_1 = arith.constant 0 : i32
    return %c0_i32, %c0_i32_0 : i32, i32
  }
  func.func @transform_7(%arg0: i32) -> (i32, i32) {
    %c0_i32 = arith.constant 0 : i32
    %c0_i32_0 = arith.constant 0 : i32
    %c0_i32_1 = arith.constant 0 : i32
    return %c0_i32, %c0_i32_0 : i32, i32
  }
  func.func @transform_8(%arg0: i32) -> (i32, i32) {
    %c0_i32 = arith.constant 0 : i32
    %c0_i32_0 = arith.constant 0 : i32
    %c0_i32_1 = arith.constant 0 : i32
    return %c0_i32, %c0_i32_0 : i32, i32
  }
  func.func @transform_9(%arg0: i32) -> (i32, i32) {
    %c0_i32 = arith.constant 0 : i32
    %c0_i32_0 = arith.constant 0 : i32
    %c0_i32_1 = arith.constant 0 : i32
    return %c0_i32, %c0_i32_0 : i32, i32
  }
  func.func @transform_10(%arg0: i32) -> (i32, i32) {
    %c0_i32 = arith.constant 0 : i32
    %c0_i32_0 = arith.constant 0 : i32
    %c0_i32_1 = arith.constant 0 : i32
    return %c0_i32, %c0_i32_0 : i32, i32
  }
  func.func @transform_11(%arg0: i32) -> (i32, i32) {
    %c0_i32 = arith.constant 0 : i32
    %c0_i32_0 = arith.constant 0 : i32
    %c0_i32_1 = arith.constant 0 : i32
    return %c0_i32, %c0_i32_0 : i32, i32
  }
  func.func @transform_12(%arg0: i32) -> (i32, i32) {
    %c0_i32 = arith.constant 0 : i32
    %c0_i32_0 = arith.constant 0 : i32
    %c0_i32_1 = arith.constant 0 : i32
    return %c0_i32, %c0_i32_0 : i32, i32
  }
  func.func @transform_13(%arg0: i32) -> (i32, i32, i32) {
    %c0_i32 = arith.constant 0 : i32
    %c0_i32_0 = arith.constant 0 : i32
    %c0_i32_1 = arith.constant 0 : i32
    return %arg0, %c0_i32, %c0_i32_0 : i32, i32, i32
  }
}

</mosaic_0001>

<llo_original>
// kernel: tpu_custom_call.1
$region0: #{tpu_custom_call.1}
  #allocation0 [shape = 'u32[]', space=smem, size = 0x4, offset = 0x4, fixed_abs, tag = 'smem constant byte address 0x4 - core index']
  #allocation1 [shape = 'u32[72,128]{1,0:T(1,128)}', space=vmem, size = 0x9000, scoped, tag = 'internal scratch']
  #allocation2 [shape = 'f32[16,32]{1,0:T(8,128)}', space=vmem, size = 0x2000, scoped, tag = 'scratch operand']
  %s0 = inlined_call_operand.hbm [shape: f32[2,8,32], index: 0, kind: input, shape index: {}]
  %s1 = inlined_call_operand.vmem [shape: f32[32,96], index: 1, kind: input, shape index: {}]
  %s2 = inlined_call_operand.vmem [shape: f32[1,96], index: 2, kind: input, shape index: {}]
  %s3 = inlined_call_operand.vmem [shape: f32[32,32], index: 3, kind: input, shape index: {}]
  %s4 = inlined_call_operand.vmem [shape: f32[1,32], index: 4, kind: input, shape index: {}]
  %s5 = inlined_call_operand.vmem [shape: f32[32,64], index: 5, kind: input, shape index: {}]
  %s6 = inlined_call_operand.vmem [shape: f32[1,64], index: 6, kind: input, shape index: {}]
  %s7 = inlined_call_operand.vmem [shape: f32[64,32], index: 7, kind: input, shape index: {}]
  %s8 = inlined_call_operand.vmem [shape: f32[1,32], index: 8, kind: input, shape index: {}]
  %s9 = inlined_call_operand.vmem [shape: f32[1,32], index: 9, kind: input, shape index: {}]
  %s10 = inlined_call_operand.vmem [shape: f32[1,32], index: 10, kind: input, shape index: {}]
  %s11 = inlined_call_operand.vmem [shape: f32[1,32], index: 11, kind: input, shape index: {}]
  %s12 = inlined_call_operand.vmem [shape: f32[1,32], index: 12, kind: input, shape index: {}]
  %s13 = inlined_call_operand.hbm [shape: f32[2,8,32], index: 13, kind: output, shape index: {}]
  %s14 = sld [smem:[#allocation0]]
  $region66: #{tpu_custom_call.1} parent=0
    _
  %s16 = ssub.s32 1, %s14
  %s17 = scalar_select 0, %s16, %s14
  $region1: #{tpu_custom_call.1} parent=0
    #allocation3 [shape = 'u8[8192]{0}', space=vmem, size = 0x2000, scoped, tag = 'input window, operand 0, single buffered']
    #allocation4 [shape = 's32[1]{0}', space=sflag, size = 0x4, scoped, tag = 'scoped memory for tpu_custom_call.1']
    #allocation5 [shape = 's32[1]{0}', space=sflag, size = 0x4, scoped, tag = 'scoped memory for tpu_custom_call.1']
    #allocation6 [shape = 'u8[8192]{0}', space=vmem, size = 0x2000, scoped, tag = 'output window, operand 0, single buffered']
    %18 = vsyncpa [#allocation4], 0
    %19 = vsyncpa [#allocation5], 0
    // Predicated region
    $region2: #{tpu_custom_call.1} parent=1 // pred_check
      _
    $region3: #{tpu_custom_call.1} parent=1 // pred_check_branch
      %21 = sbr.rel (0) target = $region5
    $region4: #{tpu_custom_call.1} parent=1 // pred_region
      %23 = vsyncadd [#allocation4], 0
      %s24 = sshll.u32 %s0, 4
      %s25 = int_to_ptr.hbm [resolvable:$true] %s24
      %s26 = sshll.u32 [#allocation3], 4
      %s27 = int_to_ptr.vmem [resolvable:$true] %s26
      %32 = dma.hbm_to_vmem [thread:$0]  %s25, 256, %s27, [#allocation4], 128, 128, 8
    $region5: #{tpu_custom_call.1} parent=1 // pred_fallthru
      _
    // Predicated region
    $region6: #{tpu_custom_call.1} parent=1 // pred_check
      _
    $region7: #{tpu_custom_call.1} parent=1 // pred_check_branch
      %34 = sbr.rel (0) target = $region9
    $region8: #{tpu_custom_call.1} parent=1 // pred_region
      _
    $region9: #{tpu_custom_call.1} parent=1 // pred_fallthru
      _
    // Predicated region
    $region10: #{tpu_custom_call.1} parent=1 // pred_check
      _
    $region11: #{tpu_custom_call.1} parent=1 // pred_check_branch
      %36 = sbr.rel (0) target = $region13
    $region12: #{tpu_custom_call.1} parent=1 // pred_region
      _
    $region13: #{tpu_custom_call.1} parent=1 // pred_fallthru
      _
    // Predicated region
    $region14: #{tpu_custom_call.1} parent=1 // pred_check
      _
    $region15: #{tpu_custom_call.1} parent=1 // pred_check_branch
      %38 = sbr.rel (0) target = $region17
    $region16: #{tpu_custom_call.1} parent=1 // pred_region
      _
    $region17: #{tpu_custom_call.1} parent=1 // pred_fallthru
      _
    // Predicated region
    $region18: #{tpu_custom_call.1} parent=1 // pred_check
      _
    $region19: #{tpu_custom_call.1} parent=1 // pred_check_branch
      %40 = sbr.rel (0) target = $region21
    $region20: #{tpu_custom_call.1} parent=1 // pred_region
      _
    $region21: #{tpu_custom_call.1} parent=1 // pred_fallthru
      _
    // Predicated region
    $region22: #{tpu_custom_call.1} parent=1 // pred_check
      _
    $region23: #{tpu_custom_call.1} parent=1 // pred_check_branch
      %42 = sbr.rel (0) target = $region25
    $region24: #{tpu_custom_call.1} parent=1 // pred_region
      _
    $region25: #{tpu_custom_call.1} parent=1 // pred_fallthru
      _
    // Predicated region
    $region26: #{tpu_custom_call.1} parent=1 // pred_check
      _
    $region27: #{tpu_custom_call.1} parent=1 // pred_check_branch
      %44 = sbr.rel (0) target = $region29
    $region28: #{tpu_custom_call.1} parent=1 // pred_region
      _
    $region29: #{tpu_custom_call.1} parent=1 // pred_fallthru
      _
    // Predicated region
    $region30: #{tpu_custom_call.1} parent=1 // pred_check
      _
    $region31: #{tpu_custom_call.1} parent=1 // pred_check_branch
      %46 = sbr.rel (0) target = $region33
    $region32: #{tpu_custom_call.1} parent=1 // pred_region
      _
    $region33: #{tpu_custom_call.1} parent=1 // pred_fallthru
      _
    // Predicated region
    $region34: #{tpu_custom_call.1} parent=1 // pred_check
      _
    $region35: #{tpu_custom_call.1} parent=1 // pred_check_branch
      %48 = sbr.rel (0) target = $region37
    $region36: #{tpu_custom_call.1} parent=1 // pred_region
      _
    $region37: #{tpu_custom_call.1} parent=1 // pred_fallthru
      _
    // Predicated region
    $region38: #{tpu_custom_call.1} parent=1 // pred_check
      _
    $region39: #{tpu_custom_call.1} parent=1 // pred_check_branch
      %50 = sbr.rel (0) target = $region41
    $region40: #{tpu_custom_call.1} parent=1 // pred_region
      _
    $region41: #{tpu_custom_call.1} parent=1 // pred_fallthru
      _
    // Predicated region
    $region42: #{tpu_custom_call.1} parent=1 // pred_check
      _
    $region43: #{tpu_custom_call.1} parent=1 // pred_check_branch
      %52 = sbr.rel (0) target = $region45
    $region44: #{tpu_custom_call.1} parent=1 // pred_region
      _
    $region45: #{tpu_custom_call.1} parent=1 // pred_fallthru
      _
    // Predicated region
    $region46: #{tpu_custom_call.1} parent=1 // pred_check
      _
    $region47: #{tpu_custom_call.1} parent=1 // pred_check_branch
      %54 = sbr.rel (0) target = $region49
    $region48: #{tpu_custom_call.1} parent=1 // pred_region
      _
    $region49: #{tpu_custom_call.1} parent=1 // pred_fallthru
      _
    // Predicated region
    $region50: #{tpu_custom_call.1} parent=1 // pred_check
      _
    $region51: #{tpu_custom_call.1} parent=1 // pred_check_branch
      %56 = sbr.rel (0) target = $region53
    $region52: #{tpu_custom_call.1} parent=1 // pred_region
      _
    $region53: #{tpu_custom_call.1} parent=1 // pred_fallthru
      _
    // Predicated region
    $region54: #{tpu_custom_call.1} parent=1 // pred_check
      _
    $region55: #{tpu_custom_call.1} parent=1 // pred_check_branch
      %58 = sbr.rel (0) target = $region57
    $region56: #{tpu_custom_call.1} parent=1 // pred_region
      %60 = dma.done [#allocation4], 256
    $region57: #{tpu_custom_call.1} parent=1 // pred_fallthru
      _
    %v61 = vld [vmem:[#allocation3] sm:$0xff]
    %v62 = vld [vmem:[#allocation3 + $0x8] sm:$0xff]
    %v63 = vld [vmem:[%s1] sm:$0xff]
    %v64 = vld [vmem:[%s1 + $0x8] sm:$0xff]
    %v65 = vld [vmem:[%s1 + $0x10] sm:$0xff]
    %v66 = vld [vmem:[%s1 + $0x18] sm:$0xff]
    %v67 = vld [vmem:[%s2] sm:$0x1]
    %v69 = vperm.slane %v67, 0
    %vm71 = vcmask 261120
    %v73 = vsel %vm71, %v61, 0
    %v76 = vsel %vm71, %v62, 0
    %78 = vmatpush.msra.mxu0 0.0
    %79 = vmatpush.msra.mxu0 0.0
    %80 = vmatpush.msra.mxu0 0.0
    %81 = vmatpush.msra.mxu0 0.0
    %82 = vmatpush.msra.mxu0 0.0
    %83 = vmatpush.msra.mxu0 0.0
    %84 = vmatpush.msra.mxu0 0.0
    %85 = vmatpush.msra.mxu0 0.0
    %86 = vmatpush.msra.mxu0 0.0
    %87 = vmatpush.msra.mxu0 0.0
    %88 = vmatpush.msra.mxu0 0.0
    %89 = vmatpush.msra.mxu0 0.0
    %90 = vmatpush.msra.mxu0 %v66
    %91 = vmatpush.msra.mxu0 %v65
    %92 = vmatpush.msra.mxu0 %v64
    %93 = vmatpush.msra.mxu0 %v63
    %94 = vmatmul.f32.gmra.mxu0 %v73
    %v95 = vpop.f32.mrf.mxu0
    %v96 = vadd.f32 %v69, %v95
    %97 = vmatmul.f32.gmra.mxu0 %v76
    %v98 = vpop.f32.mrf.mxu0
    %v99 = vadd.f32 %v69, %v98
    %100 = vdwg.mxu0
    %102 = vrot.lane.b32.xlu0 %v96, 96
    %v103 = vpop.permute.xlu0 %102
    %vm104 = vcmask 64512
    %v105 = vsel %vm104, %v96, 0
    %v107 = vsel %vm104, %v103, 0
    %109 = vmatpush.xpose.msra.mxu0 0.0
    %110 = vmatpush.xpose.msra.mxu0 0.0
    %111 = vmatpush.xpose.msra.mxu0 0.0
    %112 = vmatpush.xpose.msra.mxu0 0.0
    %113 = vmatpush.xpose.msra.mxu0 0.0
    %114 = vmatpush.xpose.msra.mxu0 0.0
    %115 = vmatpush.xpose.msra.mxu0 0.0
    %116 = vmatpush.xpose.msra.mxu0 0.0
    %117 = vmatpush.xpose.msra.mxu0 0.0
    %118 = vmatpush.xpose.msra.mxu0 0.0
    %119 = vmatpush.xpose.msra.mxu0 0.0
    %120 = vmatpush.xpose.msra.mxu0 0.0
    %121 = vmatpush.xpose.msra.mxu0 0.0
    %122 = vmatpush.xpose.msra.mxu0 0.0
    %123 = vmatpush.xpose.msra.mxu0 0.0
    %124 = vmatpush.xpose.msra.mxu0 %v107
    %125 = vmatmul.f32.gmra.mxu0 %v105
    %v126 = vpop.f32.mrf.mxu0
    %v127 = vadd.f32 0.0, %v126
    %128 = vdwg.mxu0
    %130 = vrot.lane.b32.xlu0 %v99, 96
    %v131 = vpop.permute.xlu0 %130
    %v132 = vsel %vm104, %v99, 0
    %v134 = vsel %vm104, %v131, 0
    %136 = vmatpush.xpose.msra.mxu0 0.0
    %137 = vmatpush.xpose.msra.mxu0 0.0
    %138 = vmatpush.xpose.msra.mxu0 0.0
    %139 = vmatpush.xpose.msra.mxu0 0.0
    %140 = vmatpush.xpose.msra.mxu0 0.0
    %141 = vmatpush.xpose.msra.mxu0 0.0
    %142 = vmatpush.xpose.msra.mxu0 0.0
    %143 = vmatpush.xpose.msra.mxu0 0.0
    %144 = vmatpush.xpose.msra.mxu0 0.0
    %145 = vmatpush.xpose.msra.mxu0 0.0
    %146 = vmatpush.xpose.msra.mxu0 0.0
    %147 = vmatpush.xpose.msra.mxu0 0.0
    %148 = vmatpush.xpose.msra.mxu0 0.0
    %149 = vmatpush.xpose.msra.mxu0 0.0
    %150 = vmatpush.xpose.msra.mxu0 0.0
    %151 = vmatpush.xpose.msra.mxu0 %v134
    %152 = vmatmul.f32.gmra.mxu0 %v132
    %v153 = vpop.f32.mrf.mxu0
    %v154 = vadd.f32 0.0, %v153
    %155 = vdwg.mxu0
    %v156 = vsel %vm104, %v127, -inf
    %157 = vmax.xlane.f32.xlu0 %v156
    %v158 = vpop.xlane.xlu0 %157
    %v159 = vsel %vm104, %v154, -inf
    %160 = vmax.xlane.f32.xlu0 %v159
    %v161 = vpop.xlane.xlu0 %160
    %v162 = vsub.f32 %v127, %v158
    %v163 = vsub.f32 %v154, %v161
    %v164 = vmul.f32 %v162, 1.442695
    %v165 = vpow.pop %v164
    %v166 = vmul.f32 %v163, 1.442695
    %v167 = vpow.pop %v166
    %v168 = vsel %vm104, %v165, 0.0
    %169 = vadd.xlane.f32.xlu0 %v168
    %v170 = vpop.xlane.xlu0 %169
    %v171 = vsel %vm104, %v167, 0.0
    %172 = vadd.xlane.f32.xlu0 %v171
    %v173 = vpop.xlane.xlu0 %172
    %v174 = vrcp.pop %v170
    %v175 = vmul.f32 %v170, %v174
    %v176 = vsub.f32 1.0, %v175
    %v177 = vmul.f32 %v174, %v176
    %v178 = vadd.f32 %v174, %v177
    %vm179 = vweird.f32 %v170
    %vm180 = vweird.f32 %v174
    %vm181 = vmor %vm179, %vm180
    %v182 = vsel %vm181, %v174, %v178
    %v183 = vand.u32 2147483647, %v170
    %vm184 = vcmp.eq.f32.partialorder %v183, 8.507059e+37
    %v185 = vand.u32 %v170, 2147483648
    %v186 = vor.u32 1.1754944e-38, %v185
    %v187 = vsel %vm184, %v186, %v182
    %v188 = vrcp.pop %v173
    %v189 = vmul.f32 %v173, %v188
    %v190 = vsub.f32 1.0, %v189
    %v191 = vmul.f32 %v188, %v190
    %v192 = vadd.f32 %v188, %v191
    %vm193 = vweird.f32 %v173
    %vm194 = vweird.f32 %v188
    %vm195 = vmor %vm193, %vm194
    %v196 = vsel %vm195, %v188, %v192
    %v197 = vand.u32 2147483647, %v173
    %vm198 = vcmp.eq.f32.partialorder %v197, 8.507059e+37
    %v199 = vand.u32 %v173, 2147483648
    %v200 = vor.u32 1.1754944e-38, %v199
    %v201 = vsel %vm198, %v200, %v196
    %v202 = vmul.f32 %v165, %v187
    %v203 = vmul.f32 %v167, %v201
    %204 = vrot.lane.b32.xlu0 %v96, 64
    %v205 = vpop.permute.xlu0 %204
    %v208 = vsel %vm104, %v202, 0
    %210 = vmatpush.msra.mxu0 0.0
    %211 = vmatpush.msra.mxu0 0.0
    %212 = vmatpush.msra.mxu0 0.0
    %213 = vmatpush.msra.mxu0 0.0
    %214 = vmatpush.msra.mxu0 0.0
    %215 = vmatpush.msra.mxu0 0.0
    %216 = vmatpush.msra.mxu0 0.0
    %217 = vmatpush.msra.mxu0 0.0
    %218 = vmatpush.msra.mxu0 0.0
    %219 = vmatpush.msra.mxu0 0.0
    %220 = vmatpush.msra.mxu0 0.0
    %221 = vmatpush.msra.mxu0 0.0
    %222 = vmatpush.msra.mxu0 0.0
    %223 = vmatpush.msra.mxu0 0.0
    %224 = vmatpush.msra.mxu0 0.0
    %225 = vmatpush.msra.mxu0 %v205
    %226 = vmatmul.f32.gmra.mxu0 %v208
    %v227 = vpop.f32.mrf.mxu0
    %v228 = vadd.f32 0.0, %v227
    %229 = vdwg.mxu0
    %230 = vrot.lane.b32.xlu0 %v99, 64
    %v231 = vpop.permute.xlu0 %230
    %v234 = vsel %vm104, %v203, 0
    %236 = vmatpush.msra.mxu0 0.0
    %237 = vmatpush.msra.mxu0 0.0
    %238 = vmatpush.msra.mxu0 0.0
    %239 = vmatpush.msra.mxu0 0.0
    %240 = vmatpush.msra.mxu0 0.0
    %241 = vmatpush.msra.mxu0 0.0
    %242 = vmatpush.msra.mxu0 0.0
    %243 = vmatpush.msra.mxu0 0.0
    %244 = vmatpush.msra.mxu0 0.0
    %245 = vmatpush.msra.mxu0 0.0
    %246 = vmatpush.msra.mxu0 0.0
    %247 = vmatpush.msra.mxu0 0.0
    %248 = vmatpush.msra.mxu0 0.0
    %249 = vmatpush.msra.mxu0 0.0
    %250 = vmatpush.msra.mxu0 0.0
    %251 = vmatpush.msra.mxu0 %v231
    %252 = vmatmul.f32.gmra.mxu0 %v234
    %v253 = vpop.f32.mrf.mxu0
    %v254 = vadd.f32 0.0, %v253
    %255 = vdwg.mxu0
    %256 = vst.msk [vmem:[#allocation2] sm:$0xff] %vm104, %v228
    %257 = vst.msk [vmem:[#allocation2 + $0x8] sm:$0xff] %vm104, %v254
    %258 = vrot.lane.b32.xlu0 %v96, 120
    %v259 = vpop.permute.xlu0 %258
    %260 = vrot.lane.b32.xlu0 %v96, 88
    %v261 = vpop.permute.xlu0 %260
    %v262 = vsel %vm104, %v259, 0
    %v264 = vsel %vm104, %v261, 0
    %266 = vmatpush.xpose.msra.mxu0 0.0
    %267 = vmatpush.xpose.msra.mxu0 0.0
    %268 = vmatpush.xpose.msra.mxu0 0.0
    %269 = vmatpush.xpose.msra.mxu0 0.0
    %270 = vmatpush.xpose.msra.mxu0 0.0
    %271 = vmatpush.xpose.msra.mxu0 0.0
    %272 = vmatpush.xpose.msra.mxu0 0.0
    %273 = vmatpush.xpose.msra.mxu0 0.0
    %274 = vmatpush.xpose.msra.mxu0 0.0
    %275 = vmatpush.xpose.msra.mxu0 0.0
    %276 = vmatpush.xpose.msra.mxu0 0.0
    %277 = vmatpush.xpose.msra.mxu0 0.0
    %278 = vmatpush.xpose.msra.mxu0 0.0
    %279 = vmatpush.xpose.msra.mxu0 0.0
    %280 = vmatpush.xpose.msra.mxu0 0.0
    %281 = vmatpush.xpose.msra.mxu0 %v264
    %282 = vmatmul.f32.gmra.mxu0 %v262
    %v283 = vpop.f32.mrf.mxu0
    %v284 = vadd.f32 0.0, %v283
    %285 = vdwg.mxu0
    %286 = vrot.lane.b32.xlu0 %v99, 120
    %v287 = vpop.permute.xlu0 %286
    %288 = vrot.lane.b32.xlu0 %v99, 88
    %v289 = vpop.permute.xlu0 %288
    %v290 = vsel %vm104, %v287, 0
    %v292 = vsel %vm104, %v289, 0
    %294 = vmatpush.xpose.msra.mxu0 0.0
    %295 = vmatpush.xpose.msra.mxu0 0.0
    %296 = vmatpush.xpose.msra.mxu0 0.0
    %297 = vmatpush.xpose.msra.mxu0 0.0
    %298 = vmatpush.xpose.msra.mxu0 0.0
    %299 = vmatpush.xpose.msra.mxu0 0.0
    %300 = vmatpush.xpose.msra.mxu0 0.0
    %301 = vmatpush.xpose.msra.mxu0 0.0
    %302 = vmatpush.xpose.msra.mxu0 0.0
    %303 = vmatpush.xpose.msra.mxu0 0.0
    %304 = vmatpush.xpose.msra.mxu0 0.0
    %305 = vmatpush.xpose.msra.mxu0 0.0
    %306 = vmatpush.xpose.msra.mxu0 0.0
    %307 = vmatpush.xpose.msra.mxu0 0.0
    %308 = vmatpush.xpose.msra.mxu0 0.0
    %309 = vmatpush.xpose.msra.mxu0 %v292
    %310 = vmatmul.f32.gmra.mxu0 %v290
    %v311 = vpop.f32.mrf.mxu0
    %v312 = vadd.f32 0.0, %v311
    %313 = vdwg.mxu0
    %v314 = vsel %vm104, %v284, -inf
    %315 = vmax.xlane.f32.xlu0 %v314
    %v316 = vpop.xlane.xlu0 %315
    %v317 = vsel %vm104, %v312, -inf
    %318 = vmax.xlane.f32.xlu0 %v317
    %v319 = vpop.xlane.xlu0 %318
    %v320 = vsub.f32 %v284, %v316
    %v321 = vsub.f32 %v312, %v319
    %v322 = vmul.f32 %v320, 1.442695
    %v323 = vpow.pop %v322
    %v324 = vmul.f32 %v321, 1.442695
    %v325 = vpow.pop %v324
    %v326 = vsel %vm104, %v323, 0.0
    %327 = vadd.xlane.f32.xlu0 %v326
    %v328 = vpop.xlane.xlu0 %327
    %v329 = vsel %vm104, %v325, 0.0
    %330 = vadd.xlane.f32.xlu0 %v329
    %v331 = vpop.xlane.xlu0 %330
    %v332 = vrcp.pop %v328
    %v333 = vmul.f32 %v328, %v332
    %v334 = vsub.f32 1.0, %v333
    %v335 = vmul.f32 %v332, %v334
    %v336 = vadd.f32 %v332, %v335
    %vm337 = vweird.f32 %v328
    %vm338 = vweird.f32 %v332
    %vm339 = vmor %vm337, %vm338
    %v340 = vsel %vm339, %v332, %v336
    %v341 = vand.u32 2147483647, %v328
    %vm342 = vcmp.eq.f32.partialorder %v341, 8.507059e+37
    %v343 = vand.u32 %v328, 2147483648
    %v344 = vor.u32 1.1754944e-38, %v343
    %v345 = vsel %vm342, %v344, %v340
    %v346 = vrcp.pop %v331
    %v347 = vmul.f32 %v331, %v346
    %v348 = vsub.f32 1.0, %v347
    %v349 = vmul.f32 %v346, %v348
    %v350 = vadd.f32 %v346, %v349
    %vm351 = vweird.f32 %v331
    %vm352 = vweird.f32 %v346
    %vm353 = vmor %vm351, %vm352
    %v354 = vsel %vm353, %v346, %v350
    %v355 = vand.u32 2147483647, %v331
    %vm356 = vcmp.eq.f32.partialorder %v355, 8.507059e+37
    %v357 = vand.u32 %v331, 2147483648
    %v358 = vor.u32 1.1754944e-38, %v357
    %v359 = vsel %vm356, %v358, %v354
    %v360 = vmul.f32 %v323, %v345
    %v361 = vmul.f32 %v325, %v359
    %362 = vrot.lane.b32.xlu0 %v96, 56
    %v363 = vpop.permute.xlu0 %362
    %v366 = vsel %vm104, %v360, 0
    %368 = vmatpush.msra.mxu0 0.0
    %369 = vmatpush.msra.mxu0 0.0
    %370 = vmatpush.msra.mxu0 0.0
    %371 = vmatpush.msra.mxu0 0.0
    %372 = vmatpush.msra.mxu0 0.0
    %373 = vmatpush.msra.mxu0 0.0
    %374 = vmatpush.msra.mxu0 0.0
    %375 = vmatpush.msra.mxu0 0.0
    %376 = vmatpush.msra.mxu0 0.0
    %377 = vmatpush.msra.mxu0 0.0
    %378 = vmatpush.msra.mxu0 0.0
    %379 = vmatpush.msra.mxu0 0.0
    %380 = vmatpush.msra.mxu0 0.0
    %381 = vmatpush.msra.mxu0 0.0
    %382 = vmatpush.msra.mxu0 0.0
    %383 = vmatpush.msra.mxu0 %v363
    %384 = vmatmul.f32.gmra.mxu0 %v366
    %v385 = vpop.f32.mrf.mxu0
    %v386 = vadd.f32 0.0, %v385
    %387 = vdwg.mxu0
    %388 = vrot.lane.b32.xlu0 %v99, 56
    %v389 = vpop.permute.xlu0 %388
    %v392 = vsel %vm104, %v361, 0
    %394 = vmatpush.msra.mxu0 0.0
    %395 = vmatpush.msra.mxu0 0.0
    %396 = vmatpush.msra.mxu0 0.0
    %397 = vmatpush.msra.mxu0 0.0
    %398 = vmatpush.msra.mxu0 0.0
    %399 = vmatpush.msra.mxu0 0.0
    %400 = vmatpush.msra.mxu0 0.0
    %401 = vmatpush.msra.mxu0 0.0
    %402 = vmatpush.msra.mxu0 0.0
    %403 = vmatpush.msra.mxu0 0.0
    %404 = vmatpush.msra.mxu0 0.0
    %405 = vmatpush.msra.mxu0 0.0
    %406 = vmatpush.msra.mxu0 0.0
    %407 = vmatpush.msra.mxu0 0.0
    %408 = vmatpush.msra.mxu0 0.0
    %409 = vmatpush.msra.mxu0 %v389
    %410 = vmatmul.f32.gmra.mxu0 %v392
    %v411 = vpop.f32.mrf.mxu0
    %v412 = vadd.f32 0.0, %v411
    %413 = vdwg.mxu0
    %416 = vrot.lane.b32.xlu0 %v386, 8
    %v417 = vpop.permute.xlu0 %416
    %418 = vrot.lane.b32.xlu0 %v412, 8
    %v419 = vpop.permute.xlu0 %418
    %vm422 = vcmask 130112
    %423 = vst.msk [vmem:[#allocation2] sm:$0xff] %vm422, %v417
    %424 = vst.msk [vmem:[#allocation2 + $0x8] sm:$0xff] %vm422, %v419
    %425 = vrot.lane.b32.xlu0 %v96, 112
    %v426 = vpop.permute.xlu0 %425
    %427 = vrot.lane.b32.xlu0 %v96, 80
    %v428 = vpop.permute.xlu0 %427
    %v429 = vsel %vm104, %v426, 0
    %v431 = vsel %vm104, %v428, 0
    %433 = vmatpush.xpose.msra.mxu0 0.0
    %434 = vmatpush.xpose.msra.mxu0 0.0
    %435 = vmatpush.xpose.msra.mxu0 0.0
    %436 = vmatpush.xpose.msra.mxu0 0.0
    %437 = vmatpush.xpose.msra.mxu0 0.0
    %438 = vmatpush.xpose.msra.mxu0 0.0
    %439 = vmatpush.xpose.msra.mxu0 0.0
    %440 = vmatpush.xpose.msra.mxu0 0.0
    %441 = vmatpush.xpose.msra.mxu0 0.0
    %442 = vmatpush.xpose.msra.mxu0 0.0
    %443 = vmatpush.xpose.msra.mxu0 0.0
    %444 = vmatpush.xpose.msra.mxu0 0.0
    %445 = vmatpush.xpose.msra.mxu0 0.0
    %446 = vmatpush.xpose.msra.mxu0 0.0
    %447 = vmatpush.xpose.msra.mxu0 0.0
    %448 = vmatpush.xpose.msra.mxu0 %v431
    %449 = vmatmul.f32.gmra.mxu0 %v429
    %v450 = vpop.f32.mrf.mxu0
    %v451 = vadd.f32 0.0, %v450
    %452 = vdwg.mxu0
    %453 = vrot.lane.b32.xlu0 %v99, 112
    %v454 = vpop.permute.xlu0 %453
    %455 = vrot.lane.b32.xlu0 %v99, 80
    %v456 = vpop.permute.xlu0 %455
    %v457 = vsel %vm104, %v454, 0
    %v459 = vsel %vm104, %v456, 0
    %461 = vmatpush.xpose.msra.mxu0 0.0
    %462 = vmatpush.xpose.msra.mxu0 0.0
    %463 = vmatpush.xpose.msra.mxu0 0.0
    %464 = vmatpush.xpose.msra.mxu0 0.0
    %465 = vmatpush.xpose.msra.mxu0 0.0
    %466 = vmatpush.xpose.msra.mxu0 0.0
    %467 = vmatpush.xpose.msra.mxu0 0.0
    %468 = vmatpush.xpose.msra.mxu0 0.0
    %469 = vmatpush.xpose.msra.mxu0 0.0
    %470 = vmatpush.xpose.msra.mxu0 0.0
    %471 = vmatpush.xpose.msra.mxu0 0.0
    %472 = vmatpush.xpose.msra.mxu0 0.0
    %473 = vmatpush.xpose.msra.mxu0 0.0
    %474 = vmatpush.xpose.msra.mxu0 0.0
    %475 = vmatpush.xpose.msra.mxu0 0.0
    %476 = vmatpush.xpose.msra.mxu0 %v459
    %477 = vmatmul.f32.gmra.mxu0 %v457
    %v478 = vpop.f32.mrf.mxu0
    %v479 = vadd.f32 0.0, %v478
    %480 = vdwg.mxu0
    %v481 = vsel %vm104, %v451, -inf
    %482 = vmax.xlane.f32.xlu0 %v481
    %v483 = vpop.xlane.xlu0 %482
    %v484 = vsel %vm104, %v479, -inf
    %485 = vmax.xlane.f32.xlu0 %v484
    %v486 = vpop.xlane.xlu0 %485
    %v487 = vsub.f32 %v451, %v483
    %v488 = vsub.f32 %v479, %v486
    %v489 = vmul.f32 %v487, 1.442695
    %v490 = vpow.pop %v489
    %v491 = vmul.f32 %v488, 1.442695
    %v492 = vpow.pop %v491
    %v493 = vsel %vm104, %v490, 0.0
    %494 = vadd.xlane.f32.xlu0 %v493
    %v495 = vpop.xlane.xlu0 %494
    %v496 = vsel %vm104, %v492, 0.0
    %497 = vadd.xlane.f32.xlu0 %v496
    %v498 = vpop.xlane.xlu0 %497
    %v499 = vrcp.pop %v495
    %v500 = vmul.f32 %v495, %v499
    %v501 = vsub.f32 1.0, %v500
    %v502 = vmul.f32 %v499, %v501
    %v503 = vadd.f32 %v499, %v502
    %vm504 = vweird.f32 %v495
    %vm505 = vweird.f32 %v499
    %vm506 = vmor %vm504, %vm505
    %v507 = vsel %vm506, %v499, %v503
    %v508 = vand.u32 2147483647, %v495
    %vm509 = vcmp.eq.f32.partialorder %v508, 8.507059e+37
    %v510 = vand.u32 %v495, 2147483648
    %v511 = vor.u32 1.1754944e-38, %v510
    %v512 = vsel %vm509, %v511, %v507
    %v513 = vrcp.pop %v498
    %v514 = vmul.f32 %v498, %v513
    %v515 = vsub.f32 1.0, %v514
    %v516 = vmul.f32 %v513, %v515
    %v517 = vadd.f32 %v513, %v516
    %vm518 = vweird.f32 %v498
    %vm519 = vweird.f32 %v513
    %vm520 = vmor %vm518, %vm519
    %v521 = vsel %vm520, %v513, %v517
    %v522 = vand.u32 2147483647, %v498
    %vm523 = vcmp.eq.f32.partialorder %v522, 8.507059e+37
    %v524 = vand.u32 %v498, 2147483648
    %v525 = vor.u32 1.1754944e-38, %v524
    %v526 = vsel %vm523, %v525, %v521
    %v527 = vmul.f32 %v490, %v512
    %v528 = vmul.f32 %v492, %v526
    %529 = vrot.lane.b32.xlu0 %v96, 48
    %v530 = vpop.permute.xlu0 %529
    %v533 = vsel %vm104, %v527, 0
    %535 = vmatpush.msra.mxu0 0.0
    %536 = vmatpush.msra.mxu0 0.0
    %537 = vmatpush.msra.mxu0 0.0
    %538 = vmatpush.msra.mxu0 0.0
    %539 = vmatpush.msra.mxu0 0.0
    %540 = vmatpush.msra.mxu0 0.0
    %541 = vmatpush.msra.mxu0 0.0
    %542 = vmatpush.msra.mxu0 0.0
    %543 = vmatpush.msra.mxu0 0.0
    %544 = vmatpush.msra.mxu0 0.0
    %545 = vmatpush.msra.mxu0 0.0
    %546 = vmatpush.msra.mxu0 0.0
    %547 = vmatpush.msra.mxu0 0.0
    %548 = vmatpush.msra.mxu0 0.0
    %549 = vmatpush.msra.mxu0 0.0
    %550 = vmatpush.msra.mxu0 %v530
    %551 = vmatmul.f32.gmra.mxu0 %v533
    %v552 = vpop.f32.mrf.mxu0
    %v553 = vadd.f32 0.0, %v552
    %554 = vdwg.mxu0
    %555 = vrot.lane.b32.xlu0 %v99, 48
    %v556 = vpop.permute.xlu0 %555
    %v559 = vsel %vm104, %v528, 0
    %561 = vmatpush.msra.mxu0 0.0
    %562 = vmatpush.msra.mxu0 0.0
    %563 = vmatpush.msra.mxu0 0.0
    %564 = vmatpush.msra.mxu0 0.0
    %565 = vmatpush.msra.mxu0 0.0
    %566 = vmatpush.msra.mxu0 0.0
    %567 = vmatpush.msra.mxu0 0.0
    %568 = vmatpush.msra.mxu0 0.0
    %569 = vmatpush.msra.mxu0 0.0
    %570 = vmatpush.msra.mxu0 0.0
    %571 = vmatpush.msra.mxu0 0.0
    %572 = vmatpush.msra.mxu0 0.0
    %573 = vmatpush.msra.mxu0 0.0
    %574 = vmatpush.msra.mxu0 0.0
    %575 = vmatpush.msra.mxu0 0.0
    %576 = vmatpush.msra.mxu0 %v556
    %577 = vmatmul.f32.gmra.mxu0 %v559
    %v578 = vpop.f32.mrf.mxu0
    %v579 = vadd.f32 0.0, %v578
    %580 = vdwg.mxu0
    %583 = vrot.lane.b32.xlu0 %v553, 16
    %v584 = vpop.permute.xlu0 %583
    %585 = vrot.lane.b32.xlu0 %v579, 16
    %v586 = vpop.permute.xlu0 %585
    %vm589 = vcmask 195712
    %590 = vst.msk [vmem:[#allocation2] sm:$0xff] %vm589, %v584
    %591 = vst.msk [vmem:[#allocation2 + $0x8] sm:$0xff] %vm589, %v586
    %592 = vrot.lane.b32.xlu0 %v96, 104
    %v593 = vpop.permute.xlu0 %592
    %594 = vrot.lane.b32.xlu0 %v96, 72
    %v595 = vpop.permute.xlu0 %594
    %v596 = vsel %vm104, %v593, 0
    %v598 = vsel %vm104, %v595, 0
    %600 = vmatpush.xpose.msra.mxu0 0.0
    %601 = vmatpush.xpose.msra.mxu0 0.0
    %602 = vmatpush.xpose.msra.mxu0 0.0
    %603 = vmatpush.xpose.msra.mxu0 0.0
    %604 = vmatpush.xpose.msra.mxu0 0.0
    %605 = vmatpush.xpose.msra.mxu0 0.0
    %606 = vmatpush.xpose.msra.mxu0 0.0
    %607 = vmatpush.xpose.msra.mxu0 0.0
    %608 = vmatpush.xpose.msra.mxu0 0.0
    %609 = vmatpush.xpose.msra.mxu0 0.0
    %610 = vmatpush.xpose.msra.mxu0 0.0
    %611 = vmatpush.xpose.msra.mxu0 0.0
    %612 = vmatpush.xpose.msra.mxu0 0.0
    %613 = vmatpush.xpose.msra.mxu0 0.0
    %614 = vmatpush.xpose.msra.mxu0 0.0
    %615 = vmatpush.xpose.msra.mxu0 %v598
    %616 = vmatmul.f32.gmra.mxu0 %v596
    %v617 = vpop.f32.mrf.mxu0
    %v618 = vadd.f32 0.0, %v617
    %619 = vdwg.mxu0
    %620 = vrot.lane.b32.xlu0 %v99, 104
    %v621 = vpop.permute.xlu0 %620
    %622 = vrot.lane.b32.xlu0 %v99, 72
    %v623 = vpop.permute.xlu0 %622
    %v624 = vsel %vm104, %v621, 0
    %v626 = vsel %vm104, %v623, 0
    %628 = vmatpush.xpose.msra.mxu0 0.0
    %629 = vmatpush.xpose.msra.mxu0 0.0
    %630 = vmatpush.xpose.msra.mxu0 0.0
    %631 = vmatpush.xpose.msra.mxu0 0.0
    %632 = vmatpush.xpose.msra.mxu0 0.0
    %633 = vmatpush.xpose.msra.mxu0 0.0
    %634 = vmatpush.xpose.msra.mxu0 0.0
    %635 = vmatpush.xpose.msra.mxu0 0.0
    %636 = vmatpush.xpose.msra.mxu0 0.0
    %637 = vmatpush.xpose.msra.mxu0 0.0
    %638 = vmatpush.xpose.msra.mxu0 0.0
    %639 = vmatpush.xpose.msra.mxu0 0.0
    %640 = vmatpush.xpose.msra.mxu0 0.0
    %641 = vmatpush.xpose.msra.mxu0 0.0
    %642 = vmatpush.xpose.msra.mxu0 0.0
    %643 = vmatpush.xpose.msra.mxu0 %v626
    %644 = vmatmul.f32.gmra.mxu0 %v624
    %v645 = vpop.f32.mrf.mxu0
    %v646 = vadd.f32 0.0, %v645
    %647 = vdwg.mxu0
    %v648 = vsel %vm104, %v618, -inf
    %649 = vmax.xlane.f32.xlu0 %v648
    %v650 = vpop.xlane.xlu0 %649
    %v651 = vsel %vm104, %v646, -inf
    %652 = vmax.xlane.f32.xlu0 %v651
    %v653 = vpop.xlane.xlu0 %652
    %v654 = vsub.f32 %v618, %v650
    %v655 = vsub.f32 %v646, %v653
    %v656 = vmul.f32 %v654, 1.442695
    %v657 = vpow.pop %v656
    %v658 = vmul.f32 %v655, 1.442695
    %v659 = vpow.pop %v658
    %v660 = vsel %vm104, %v657, 0.0
    %661 = vadd.xlane.f32.xlu0 %v660
    %v662 = vpop.xlane.xlu0 %661
    %v663 = vsel %vm104, %v659, 0.0
    %664 = vadd.xlane.f32.xlu0 %v663
    %v665 = vpop.xlane.xlu0 %664
    %v666 = vrcp.pop %v662
    %v667 = vmul.f32 %v662, %v666
    %v668 = vsub.f32 1.0, %v667
    %v669 = vmul.f32 %v666, %v668
    %v670 = vadd.f32 %v666, %v669
    %vm671 = vweird.f32 %v662
    %vm672 = vweird.f32 %v666
    %vm673 = vmor %vm671, %vm672
    %v674 = vsel %vm673, %v666, %v670
    %v675 = vand.u32 2147483647, %v662
    %vm676 = vcmp.eq.f32.partialorder %v675, 8.507059e+37
    %v677 = vand.u32 %v662, 2147483648
    %v678 = vor.u32 1.1754944e-38, %v677
    %v679 = vsel %vm676, %v678, %v674
    %v680 = vrcp.pop %v665
    %v681 = vmul.f32 %v665, %v680
    %v682 = vsub.f32 1.0, %v681
    %v683 = vmul.f32 %v680, %v682
    %v684 = vadd.f32 %v680, %v683
    %vm685 = vweird.f32 %v665
    %vm686 = vweird.f32 %v680
    %vm687 = vmor %vm685, %vm686
    %v688 = vsel %vm687, %v680, %v684
    %v689 = vand.u32 2147483647, %v665
    %vm690 = vcmp.eq.f32.partialorder %v689, 8.507059e+37
    %v691 = vand.u32 %v665, 2147483648
    %v692 = vor.u32 1.1754944e-38, %v691
    %v693 = vsel %vm690, %v692, %v688
    %v694 = vmul.f32 %v657, %v679
    %v695 = vmul.f32 %v659, %v693
    %696 = vrot.lane.b32.xlu0 %v96, 40
    %v697 = vpop.permute.xlu0 %696
    %v700 = vsel %vm104, %v694, 0
    %702 = vmatpush.msra.mxu0 0.0
    %703 = vmatpush.msra.mxu0 0.0
    %704 = vmatpush.msra.mxu0 0.0
    %705 = vmatpush.msra.mxu0 0.0
    %706 = vmatpush.msra.mxu0 0.0
    %707 = vmatpush.msra.mxu0 0.0
    %708 = vmatpush.msra.mxu0 0.0
    %709 = vmatpush.msra.mxu0 0.0
    %710 = vmatpush.msra.mxu0 0.0
    %711 = vmatpush.msra.mxu0 0.0
    %712 = vmatpush.msra.mxu0 0.0
    %713 = vmatpush.msra.mxu0 0.0
    %714 = vmatpush.msra.mxu0 0.0
    %715 = vmatpush.msra.mxu0 0.0
    %716 = vmatpush.msra.mxu0 0.0
    %717 = vmatpush.msra.mxu0 %v697
    %718 = vmatmul.f32.gmra.mxu0 %v700
    %v719 = vpop.f32.mrf.mxu0
    %v720 = vadd.f32 0.0, %v719
    %721 = vdwg.mxu0
    %722 = vrot.lane.b32.xlu0 %v99, 40
    %v723 = vpop.permute.xlu0 %722
    %v726 = vsel %vm104, %v695, 0
    %728 = vmatpush.msra.mxu0 0.0
    %729 = vmatpush.msra.mxu0 0.0
    %730 = vmatpush.msra.mxu0 0.0
    %731 = vmatpush.msra.mxu0 0.0
    %732 = vmatpush.msra.mxu0 0.0
    %733 = vmatpush.msra.mxu0 0.0
    %734 = vmatpush.msra.mxu0 0.0
    %735 = vmatpush.msra.mxu0 0.0
    %736 = vmatpush.msra.mxu0 0.0
    %737 = vmatpush.msra.mxu0 0.0
    %738 = vmatpush.msra.mxu0 0.0
    %739 = vmatpush.msra.mxu0 0.0
    %740 = vmatpush.msra.mxu0 0.0
    %741 = vmatpush.msra.mxu0 0.0
    %742 = vmatpush.msra.mxu0 0.0
    %743 = vmatpush.msra.mxu0 %v723
    %744 = vmatmul.f32.gmra.mxu0 %v726
    %v745 = vpop.f32.mrf.mxu0
    %v746 = vadd.f32 0.0, %v745
    %747 = vdwg.mxu0
    %750 = vrot.lane.b32.xlu0 %v720, 24
    %v751 = vpop.permute.xlu0 %750
    %752 = vrot.lane.b32.xlu0 %v746, 24
    %v753 = vpop.permute.xlu0 %752
    %vm756 = vcmask 261312
    %757 = vst.msk [vmem:[#allocation2] sm:$0xff] %vm756, %v751
    %758 = vst.msk [vmem:[#allocation2 + $0x8] sm:$0xff] %vm756, %v753
    %v759 = vld [vmem:[#allocation2] sm:$0xff]
    %v760 = vld [vmem:[#allocation2 + $0x8] sm:$0xff]
    %v761 = vld [vmem:[%s3] sm:$0xff]
    %v762 = vld [vmem:[%s3 + $0x8] sm:$0xff]
    %v763 = vld [vmem:[%s3 + $0x10] sm:$0xff]
    %v764 = vld [vmem:[%s3 + $0x18] sm:$0xff]
    %v765 = vld [vmem:[%s4] sm:$0x1]
    %v767 = vperm.slane %v765, 0
    %v770 = vsel %vm71, %v759, 0
    %v773 = vsel %vm71, %v760, 0
    %775 = vmatpush.msra.mxu0 0.0
    %776 = vmatpush.msra.mxu0 0.0
    %777 = vmatpush.msra.mxu0 0.0
    %778 = vmatpush.msra.mxu0 0.0
    %779 = vmatpush.msra.mxu0 0.0
    %780 = vmatpush.msra.mxu0 0.0
    %781 = vmatpush.msra.mxu0 0.0
    %782 = vmatpush.msra.mxu0 0.0
    %783 = vmatpush.msra.mxu0 0.0
    %784 = vmatpush.msra.mxu0 0.0
    %785 = vmatpush.msra.mxu0 0.0
    %786 = vmatpush.msra.mxu0 0.0
    %787 = vmatpush.msra.mxu0 %v764
    %788 = vmatpush.msra.mxu0 %v763
    %789 = vmatpush.msra.mxu0 %v762
    %790 = vmatpush.msra.mxu0 %v761
    %791 = vmatmul.f32.gmra.mxu0 %v770
    %v792 = vpop.f32.mrf.mxu0
    %v793 = vadd.f32 %v767, %v792
    %794 = vmatmul.f32.gmra.mxu0 %v773
    %v795 = vpop.f32.mrf.mxu0
    %v796 = vadd.f32 %v767, %v795
    %797 = vdwg.mxu0
    %v798 = vadd.f32 %v61, %v793
    %v799 = vadd.f32 %v62, %v796
    %v800 = vld [vmem:[%s9] sm:$0x1]
    %v801 = vld [vmem:[%s10] sm:$0x1]
    %v802 = vsel %vm71, %v798, 0.0
    %803 = vadd.xlane.f32.xlu0 %v802
    %v804 = vpop.xlane.xlu0 %803
    %v805 = vsel %vm71, %v799, 0.0
    %806 = vadd.xlane.f32.xlu0 %v805
    %v807 = vpop.xlane.xlu0 %806
    %v808 = vrcp.pop 32.0
    %v809 = vmul.f32 32.0, %v808
    %v810 = vsub.f32 1.0, %v809
    %v811 = vmul.f32 %v808, %v810
    %v812 = vadd.f32 %v808, %v811
    %vm813 = vweird.f32 %v808
    %v814 = vsel %vm813, %v808, %v812
    %v815 = vmul.f32 %v804, %v814
    %v816 = vmul.f32 %v807, %v814
    %v817 = vsub.f32 %v798, %v815
    %v818 = vsub.f32 %v799, %v816
    %v819 = vmul.f32 %v817, %v817
    %v820 = vmul.f32 %v818, %v818
    %v821 = vsel %vm71, %v819, 0.0
    %822 = vadd.xlane.f32.xlu0 %v821
    %v823 = vpop.xlane.xlu0 %822
    %v824 = vsel %vm71, %v820, 0.0
    %825 = vadd.xlane.f32.xlu0 %v824
    %v826 = vpop.xlane.xlu0 %825
    %v827 = vmul.f32 %v823, %v814
    %v828 = vmul.f32 %v826, %v814
    %v829 = vadd.f32 %v827, 1e-05
    %v830 = vadd.f32 %v828, 1e-05
    %v831 = vrsqrt.pop %v829
    %v832 = vmul.f32 %v831, %v829
    %v833 = vmul.f32 %v832, %v831
    %v834 = vmul.f32 0.5, %v833
    %v835 = vsub.f32 1.5, %v834
    %v836 = vmul.f32 %v831, %v835
    %vm837 = vweird.f32 %v829
    %vm838 = vweird.f32 %v831
    %vm839 = vmor %vm837, %vm838
    %v840 = vsel %vm839, %v831, %v836
    %v841 = vrsqrt.pop %v830
    %v842 = vmul.f32 %v841, %v830
    %v843 = vmul.f32 %v842, %v841
    %v844 = vmul.f32 0.5, %v843
    %v845 = vsub.f32 1.5, %v844
    %v846 = vmul.f32 %v841, %v845
    %vm847 = vweird.f32 %v830
    %vm848 = vweird.f32 %v841
    %vm849 = vmor %vm847, %vm848
    %v850 = vsel %vm849, %v841, %v846
    %v851 = vmul.f32 %v817, %v840
    %v852 = vmul.f32 %v818, %v850
    %v854 = vperm.slane %v800, 0
    %v856 = vmul.f32 %v851, %v854
    %v857 = vmul.f32 %v852, %v854
    %v859 = vperm.slane %v801, 0
    %v861 = vadd.f32 %v856, %v859
    %v862 = vadd.f32 %v857, %v859
    %v863 = vld [vmem:[%s5] sm:$0xff]
    %v864 = vld [vmem:[%s5 + $0x8] sm:$0xff]
    %v865 = vld [vmem:[%s5 + $0x10] sm:$0xff]
    %v866 = vld [vmem:[%s5 + $0x18] sm:$0xff]
    %v867 = vld [vmem:[%s6] sm:$0x1]
    %v869 = vperm.slane %v867, 0
    %v872 = vsel %vm71, %v861, 0
    %v875 = vsel %vm71, %v862, 0
    %877 = vmatpush.msra.mxu0 0.0
    %878 = vmatpush.msra.mxu0 0.0
    %879 = vmatpush.msra.mxu0 0.0
    %880 = vmatpush.msra.mxu0 0.0
    %881 = vmatpush.msra.mxu0 0.0
    %882 = vmatpush.msra.mxu0 0.0
    %883 = vmatpush.msra.mxu0 0.0
    %884 = vmatpush.msra.mxu0 0.0
    %885 = vmatpush.msra.mxu0 0.0
    %886 = vmatpush.msra.mxu0 0.0
    %887 = vmatpush.msra.mxu0 0.0
    %888 = vmatpush.msra.mxu0 0.0
    %889 = vmatpush.msra.mxu0 %v866
    %890 = vmatpush.msra.mxu0 %v865
    %891 = vmatpush.msra.mxu0 %v864
    %892 = vmatpush.msra.mxu0 %v863
    %893 = vmatmul.f32.gmra.mxu0 %v872
    %v894 = vpop.f32.mrf.mxu0
    %v895 = vadd.f32 %v869, %v894
    %896 = vmatmul.f32.gmra.mxu0 %v875
    %v897 = vpop.f32.mrf.mxu0
    %v898 = vadd.f32 %v869, %v897
    %899 = vdwg.mxu0
    %v900 = vmax.f32 %v895, 0.0
    %v901 = vmax.f32 %v898, 0.0
    %v902 = vld [vmem:[%s7] sm:$0xff]
    %v903 = vld [vmem:[%s7 + $0x8] sm:$0xff]
    %v904 = vld [vmem:[%s7 + $0x10] sm:$0xff]
    %v905 = vld [vmem:[%s7 + $0x18] sm:$0xff]
    %v906 = vld [vmem:[%s7 + $0x20] sm:$0xff]
    %v907 = vld [vmem:[%s7 + $0x28] sm:$0xff]
    %v908 = vld [vmem:[%s7 + $0x30] sm:$0xff]
    %v909 = vld [vmem:[%s7 + $0x38] sm:$0xff]
    %v910 = vld [vmem:[%s8] sm:$0x1]
    %v912 = vperm.slane %v910, 0
    %vm914 = vcmask 523264
    %v916 = vsel %vm914, %v900, 0
    %v919 = vsel %vm914, %v901, 0
    %921 = vmatpush.msra.mxu0 0.0
    %922 = vmatpush.msra.mxu0 0.0
    %923 = vmatpush.msra.mxu0 0.0
    %924 = vmatpush.msra.mxu0 0.0
    %925 = vmatpush.msra.mxu0 0.0
    %926 = vmatpush.msra.mxu0 0.0
    %927 = vmatpush.msra.mxu0 0.0
    %928 = vmatpush.msra.mxu0 0.0
    %929 = vmatpush.msra.mxu0 %v909
    %930 = vmatpush.msra.mxu0 %v908
    %931 = vmatpush.msra.mxu0 %v907
    %932 = vmatpush.msra.mxu0 %v906
    %933 = vmatpush.msra.mxu0 %v905
    %934 = vmatpush.msra.mxu0 %v904
    %935 = vmatpush.msra.mxu0 %v903
    %936 = vmatpush.msra.mxu0 %v902
    %937 = vmatmul.f32.gmra.mxu0 %v916
    %v938 = vpop.f32.mrf.mxu0
    %v939 = vadd.f32 %v912, %v938
    %940 = vmatmul.f32.gmra.mxu0 %v919
    %v941 = vpop.f32.mrf.mxu0
    %v942 = vadd.f32 %v912, %v941
    %943 = vdwg.mxu0
    %v944 = vadd.f32 %v861, %v939
    %v945 = vadd.f32 %v862, %v942
    %v946 = vld [vmem:[%s11] sm:$0x1]
    %v947 = vld [vmem:[%s12] sm:$0x1]
    %v948 = vsel %vm71, %v944, 0.0
    %949 = vadd.xlane.f32.xlu0 %v948
    %v950 = vpop.xlane.xlu0 %949
    %v951 = vsel %vm71, %v945, 0.0
    %952 = vadd.xlane.f32.xlu0 %v951
    %v953 = vpop.xlane.xlu0 %952
    %v954 = vmul.f32 %v950, %v814
    %v955 = vmul.f32 %v953, %v814
    %v956 = vsub.f32 %v944, %v954
    %v957 = vsub.f32 %v945, %v955
    %v958 = vmul.f32 %v956, %v956
    %v959 = vmul.f32 %v957, %v957
    %v960 = vsel %vm71, %v958, 0.0
    %961 = vadd.xlane.f32.xlu0 %v960
    %v962 = vpop.xlane.xlu0 %961
    %v963 = vsel %vm71, %v959, 0.0
    %964 = vadd.xlane.f32.xlu0 %v963
    %v965 = vpop.xlane.xlu0 %964
    %v966 = vmul.f32 %v962, %v814
    %v967 = vmul.f32 %v965, %v814
    %v968 = vadd.f32 %v966, 1e-05
    %v969 = vadd.f32 %v967, 1e-05
    %v970 = vrsqrt.pop %v968
    %v971 = vmul.f32 %v970, %v968
    %v972 = vmul.f32 %v971, %v970
    %v973 = vmul.f32 0.5, %v972
    %v974 = vsub.f32 1.5, %v973
    %v975 = vmul.f32 %v970, %v974
    %vm976 = vweird.f32 %v968
    %vm977 = vweird.f32 %v970
    %vm978 = vmor %vm976, %vm977
    %v979 = vsel %vm978, %v970, %v975
    %v980 = vrsqrt.pop %v969
    %v981 = vmul.f32 %v980, %v969
    %v982 = vmul.f32 %v981, %v980
    %v983 = vmul.f32 0.5, %v982
    %v984 = vsub.f32 1.5, %v983
    %v985 = vmul.f32 %v980, %v984
    %vm986 = vweird.f32 %v969
    %vm987 = vweird.f32 %v980
    %vm988 = vmor %vm986, %vm987
    %v989 = vsel %vm988, %v980, %v985
    %v990 = vmul.f32 %v956, %v979
    %v991 = vmul.f32 %v957, %v989
    %v993 = vperm.slane %v946, 0
    %v995 = vmul.f32 %v990, %v993
    %v996 = vmul.f32 %v991, %v993
    %v998 = vperm.slane %v947, 0
    %v1000 = vadd.f32 %v995, %v998
    %v1001 = vadd.f32 %v996, %v998
    %1002 = vst.msk [vmem:[#allocation6] sm:$0xff] %vm71, %v1000
    %1003 = vst.msk [vmem:[#allocation6 + $0x8] sm:$0xff] %vm71, %v1001
    // Predicated region
    $region58: #{tpu_custom_call.1} parent=1 // pred_check
      _
    $region59: #{tpu_custom_call.1} parent=1 // pred_check_branch
      %1005 = sbr.rel (0) target = $region61
    $region60: #{tpu_custom_call.1} parent=1 // pred_region
      %1007 = vsyncadd [#allocation5], 0
      %s1008 = sshll.u32 [#allocation6], 4
      %s1009 = int_to_ptr.vmem [resolvable:$true] %s1008
      %s1010 = sshll.u32 %s13, 4
      %s1011 = int_to_ptr.hbm [resolvable:$true] %s1010
      %1016 = dma.vmem_to_hbm [thread:$0]  %s1009, 256, %s1011, [#allocation5], 128, 128, 8
    $region61: #{tpu_custom_call.1} parent=1 // pred_fallthru
      _
    // Predicated region
    $region62: #{tpu_custom_call.1} parent=1 // pred_check
      _
    $region63: #{tpu_custom_call.1} parent=1 // pred_check_branch
      %1018 = sbr.rel (0) target = $region65
    $region64: #{tpu_custom_call.1} parent=1 // pred_region
      %1020 = dma.done [#allocation5], 256
    $region65: #{tpu_custom_call.1} parent=1 // pred_fallthru
      _
    %1021 = vsyncpa [#allocation4], 1
    %1022 = vsyncpa [#allocation5], 1

</llo_original>
